<compile_context>
chip_gen: v5e
topology: v5e:2x2
jax: 0.10.0
libtpu: 0.0.40
codegen_flags: <defaults>
</compile_context>

<pallas_src>
import functools

import jax
import jax.numpy as jnp
from jax.experimental import pallas as pl
from jax.experimental.pallas import tpu as pltpu


LANE = 128  # lane width: pad feature / hidden / class dims to multiples of this


def _round_up(v, m):
    return ((v + m - 1) // m) * m


def _default_row_tile():
    """256 rows/tile on 256-wide-MXU parts (v6e/v7x), 128 on older 128-wide parts."""
    try:
        kind = jax.devices()[0].device_kind.lower()
    except Exception:
        return 128
    if any(s in kind for s in ("v2", "v3", "v4", "v5 lite", "v5e", "v5litepod")):
        return 128
    return 256


def _vmem_limit_bytes(n_pad, tm, h_p, c_p, with_logits):
    """Explicit scoped-VMEM limit only when the tile budget exceeds defaults."""
    est = (
        2 * tm * n_pad * 2            # A row panel, double-buffered, bf16
        + 2 * n_pad * h_p * 2         # XW1 (constant-index, assume 2 buffers)
        + 2 * h_p * c_p * 2           # W2
        + 2 * 8 * (h_p + c_p) * 4     # biases (sublane-padded)
        + 2 * tm * LANE * 8           # ym + wm blocks (lane-padded)
        + n_pad * c_p * 2             # G scratch (bf16)
        + (2 * tm * c_p * 4 if with_logits else tm * c_p * 4)  # logits block(s)
    )
    est = int(est * 1.5) + (8 << 20)  # pipeline / compiler-internal headroom
    if est <= (16 << 20):             # below every generation's default scoped limit
        return None
    try:
        cap = int(pltpu.get_tpu_info().vmem_capacity_bytes * 0.875)
    except Exception:
        cap = 56 << 20                # conservative: v7x physical VMEM is 64 MiB
    return min(est, cap)


# ----------------------------------------------------------------------------
# Fused Pallas kernel: GCN layer1 (+ folded W2) + layer2 + masked CE epilogue
# ----------------------------------------------------------------------------
def fused_gcn_kernel(wm_ref, ym_ref, a_ref, xw1_ref, b1_ref, w2_ref, b2_ref,
                     *outs_and_scratch, n_cls, r, tm, with_logits):
    if with_logits:
        logits_ref, loss_ref, g_ref = outs_and_scratch
    else:
        loss_ref, g_ref = outs_and_scratch

    t = pl.program_id(0)

    @pl.when(t == 0)
    def _init():
        loss_ref[...] = jnp.zeros_like(loss_ref)

    # ---- phase 0 (t < r): layer 1 + folded W2 for destination-row tile t -----
    @pl.when(t < r)
    def _layer1():
        # A_tile @ (X @ W1): the N^2 contraction runs over H_p lanes, XW1 was
        # precomputed once outside the grid.
        h = jnp.dot(a_ref[...], xw1_ref[...], preferred_element_type=jnp.float32)
        h = jnp.maximum(h + b1_ref[...], 0.0)
        # Fold W2 now:  (A @ H) @ W2 == A @ (H @ W2)  -> scratch holds G = H @ W2.
        g = jnp.dot(h.astype(jnp.bfloat16), w2_ref[...],
                    preferred_element_type=jnp.float32)
        row0 = pl.multiple_of(t * tm, tm)
        g_ref[pl.ds(row0, tm), :] = g.astype(jnp.bfloat16)   # flat 2-D scratch write

    # ---- phase 1 (t >= r): layer 2 + fused weighted masked cross-entropy -----
    @pl.when(t >= r)
    def _layer2_and_ce():
        # Zero-copy read of the flat 2-D scratch feeds the MXU directly.
        logits = jnp.dot(a_ref[...], g_ref[...],
                         preferred_element_type=jnp.float32) + b2_ref[...]
        col = jax.lax.broadcasted_iota(jnp.int32, logits.shape, 1)
        # Kill padded class columns so softmax / argmax ignore them.
        logits = jnp.where(col < n_cls, logits, -1e30)
        if with_logits:
            logits_ref[...] = logits          # lane-dense 128-wide store

        # Weighted masked softmax cross-entropy epilogue (EUP work under MXU).
        m = jnp.max(logits, axis=-1, keepdims=True)
        z = logits - m
        lse = jnp.log(jnp.sum(jnp.exp(z), axis=-1, keepdims=True))
        logp = z - lse                        # (TM, C_p)
        # ym holds the label for masked rows, -1 for unmasked / padded rows; wm
        # holds the per-row class weight (0 where excluded), so excluded rows
        # contribute exactly zero.
        onehot = (col == ym_ref[...]).astype(jnp.float32)
        loss_ref[...] += -jnp.sum(wm_ref[...] * onehot * logp)


@functools.partial(jax.jit, static_argnames=("n_cls", "r", "tm", "with_logits"))
def fused_gcn_forward(wm, ym, a_pad, x_pad, w1, b1, w2, b2,
                      *, n_cls, r, tm, with_logits):
    n_pad = a_pad.shape[0]
    h_p = w1.shape[1]
    c_p = w2.shape[1]

    # Precompute XW1 = X @ W1 once (small XLA matmul); only (n_pad, h_p) is kept
    # resident in VMEM instead of the full (n_pad, f_in_p) feature matrix.
    # TODO(synk): keep XW1 in f32 if bit-closeness to the f32 reference matters.
    xw1 = jnp.dot(x_pad, w1, preferred_element_type=jnp.float32).astype(jnp.bfloat16)

    kernel = functools.partial(fused_gcn_kernel, n_cls=n_cls, r=r, tm=tm,
                               with_logits=with_logits)

    in_specs = [
        # per-row class weight (f32, 0 = excluded row)
        pl.BlockSpec((tm, 1), lambda t: (jnp.where(t < r, 0, t - r), 0)),
        # masked labels (int32, -1 = excluded row)
        pl.BlockSpec((tm, 1), lambda t: (jnp.where(t < r, 0, t - r), 0)),
        # normalized adjacency row panel (bf16), streamed & double-buffered
        pl.BlockSpec((tm, n_pad), lambda t: (t % r, 0)),
        # XW1 (bf16), resident (constant index)
        pl.BlockSpec((n_pad, h_p), lambda t: (0, 0)),
        pl.BlockSpec((1, h_p), lambda t: (0, 0)),         # b1 (f32)
        pl.BlockSpec((h_p, c_p), lambda t: (0, 0)),       # W2 (bf16)
        pl.BlockSpec((1, c_p), lambda t: (0, 0)),         # b2 (f32)
        # TODO(synk): pin the four constant-index operands with
        # pipeline_mode=pl.Buffered(1) to drop their second buffer on v7x.
    ]

    if with_logits:
        out_shape = (
            jax.ShapeDtypeStruct((n_pad, c_p), jnp.float32),  # logits (padded)
            jax.ShapeDtypeStruct((1, 1), jnp.float32),        # sum of masked NLL
        )
        out_specs = (
            # pinned to block 0 during phase 0, row-tiled during phase 1 so no
            # garbage block is flushed before its real write.
            pl.BlockSpec((tm, c_p), lambda t: (jnp.where(t < r, 0, t - r), 0)),
            pl.BlockSpec((1, 1), lambda t: (0, 0)),
        )
    else:
        # Loss-only path: no (n_pad, c_p) logits writeback at all.
        out_shape = jax.ShapeDtypeStruct((1, 1), jnp.float32)
        out_specs = pl.BlockSpec((1, 1), lambda t: (0, 0))

    return pl.pallas_call(
        kernel,
        out_shape=out_shape,
        grid=(2 * r,),  # phase-major: r layer-1 tiles, then r layer-2 tiles
        in_specs=in_specs,
        out_specs=out_specs,
        scratch_shapes=[
            # Flat 2-D scratch: G = relu(A@XW1+b1) @ W2, resident in VMEM.
            pltpu.VMEM((n_pad, c_p), jnp.bfloat16),
        ],
        compiler_params=pltpu.CompilerParams(
            # Sequential: phase-1 tiles depend on the full VMEM-resident G.
            dimension_semantics=("arbitrary",),
            vmem_limit_bytes=_vmem_limit_bytes(n_pad, tm, h_p, c_p, with_logits),
        ),
    )(wm, ym, a_pad, xw1, b1, w2, b2)


# ----------------------------------------------------------------------------
# Glue: adjacency normalization, parameter init, model wrapper
# ----------------------------------------------------------------------------
def gcn_norm_dense(edge_index, num_nodes):
    """Dense D^{-1/2}(A + I_remaining)D^{-1/2}; A[dst, src], duplicate edges summed."""
    src, dst = edge_index[0], edge_index[1]
    a = jnp.zeros((num_nodes, num_nodes), jnp.float32)
    a = a.at[dst, src].add(1.0)                       # multi-edges sum (PyG scatter-add)
    diag = jnp.diagonal(a)
    # add_remaining_self_loops: only nodes WITHOUT an explicit self-loop get +1.
    a = a + jnp.diag(jnp.where(diag == 0.0, 1.0, 0.0))
    deg = jnp.sum(a, axis=1)
    dinv = jnp.where(deg > 0, jax.lax.rsqrt(deg), 0.0)
    return dinv[:, None] * a * dinv[None, :]


def glorot(key, shape):
    fan_in, fan_out = shape
    limit = jnp.sqrt(6.0 / (fan_in + fan_out))
    return jax.random.uniform(key, shape, jnp.float32, -limit, limit)


def _edge_fingerprint(edge_index):
    src = edge_index[0].astype(jnp.uint32)
    dst = edge_index[1].astype(jnp.uint32)
    s = jnp.sum(src * jnp.uint32(2654435761) + dst * jnp.uint32(40503),
                dtype=jnp.uint32)
    return int(s)


class GnnModelPallas:
    """GnnModel with backbone='GCN', n_layer=2 (last layer: no relu), fused kernel."""

    def __init__(self, key, n_feat, n_hid, n_cls, n_layer=2, dropout=0.5, tm=None):
        if n_layer != 2:
            # TODO(synk): fused kernel implements the canonical 2-layer GCN; other
            # depths would need a chained / generalized multi-phase kernel.
            raise NotImplementedError("fused Pallas GCN kernel supports n_layer == 2")
        self.n_feat, self.n_hid, self.n_cls = n_feat, n_hid, n_cls
        self.dropout = dropout                 # eval-mode: identity
        self.tm = tm if tm is not None else _default_row_tile()
        self.f_in_p = _round_up(n_feat, LANE)
        self.h_p = _round_up(n_hid, LANE)
        self.c_p = _round_up(n_cls, LANE)

        k1, k2 = jax.random.split(key)
        w1 = glorot(k1, (n_feat, n_hid))
        w2 = glorot(k2, (n_hid, n_cls))
        # Zero-padded, lane-dense (multiples of 128) parameters; zero pads do not
        # change the real outputs. bf16 weights, f32 biases (accumulation is f32).
        self.w1 = (jnp.zeros((self.f_in_p, self.h_p), jnp.bfloat16)
                   .at[:n_feat, :n_hid].set(w1.astype(jnp.bfloat16)))
        self.b1 = jnp.zeros((1, self.h_p), jnp.float32)
        self.w2 = (jnp.zeros((self.h_p, self.c_p), jnp.bfloat16)
                   .at[:n_hid, :n_cls].set(w2.astype(jnp.bfloat16)))
        self.b2 = jnp.zeros((1, self.c_p), jnp.float32)

        self._graph_cache = None   # ((n, E, fingerprint), padded bf16 A_norm)

    def reset_graph_cache(self):
        self._graph_cache = None

    def _get_graph(self, edge_index, n):
        # gcn_norm is computed once per graph and cached (amortized across calls);
        # the cache key includes an edge fingerprint so a changed edge_index with
        # the same node count is not silently reused.
        key = (n, int(edge_index.shape[1]), _edge_fingerprint(edge_index))
        if self._graph_cache is not None and self._graph_cache[0] == key:
            return self._graph_cache[1]
        a = gcn_norm_dense(edge_index, n)
        n_pad = _round_up(n, self.tm)
        a_pad = jnp.zeros((n_pad, n_pad), jnp.float32).at[:n, :n].set(a)
        # TODO(synk): int8 (v5e/v6e) or fp8 (v7x) A_norm would halve the dominant
        # HBM stream again; bf16 kept for portability / accuracy here.
        a_pad = a_pad.astype(jnp.bfloat16)
        self._graph_cache = (key, a_pad)
        return a_pad

    def forward(self, x, edge_index, y=None, mask=None, weight=None, logit=False):
        n = x.shape[0]
        a_pad = self._get_graph(edge_index, n)
        n_pad = a_pad.shape[0]
        r = n_pad // self.tm

        x_pad = (jnp.zeros((n_pad, self.f_in_p), jnp.bfloat16)
                 .at[:n, : self.n_feat].set(x.astype(jnp.bfloat16)))

        if logit:
            ym = jnp.full((n_pad, 1), -1, jnp.int32)
            wm = jnp.zeros((n_pad, 1), jnp.float32)
            logits_pad, _ = fused_gcn_forward(
                wm, ym, a_pad, x_pad, self.w1, self.b1, self.w2, self.b2,
                n_cls=self.n_cls, r=r, tm=self.tm, with_logits=True)
            return logits_pad[:n, : self.n_cls]

        assert y is not None and mask is not None, "y and mask are required for loss"
        mask_b = mask.astype(bool)
        y_i = y.astype(jnp.int32)
        ym_rows = jnp.where(mask_b, y_i, -1)
        if weight is None:
            w_rows = jnp.where(mask_b, 1.0, 0.0).astype(jnp.float32)
        else:
            # F.cross_entropy(weight=...): per-target class weight, mean reduction
            # normalizes by the sum of the selected weights.
            w_rows = jnp.where(mask_b, weight.astype(jnp.float32)[y_i], 0.0)
        ym = jnp.full((n_pad, 1), -1, jnp.int32).at[:n, 0].set(ym_rows)
        wm = jnp.zeros((n_pad, 1), jnp.float32).at[:n, 0].set(w_rows)

        # Loss-only kernel variant: no (n_pad, c_p) logits writeback to HBM.
        loss_sum = fused_gcn_forward(
            wm, ym, a_pad, x_pad, self.w1, self.b1, self.w2, self.b2,
            n_cls=self.n_cls, r=r, tm=self.tm, with_logits=False)

        denom = jnp.maximum(jnp.sum(w_rows), 1e-12)   # all-False-mask guard
        return loss_sum[0, 0] / denom


# ----------------------------------------------------------------------------
if __name__ == "__main__":
    key = jax.random.PRNGKey(0)
    k_x, k_e, k_y, k_p = jax.random.split(key, 4)

    N, N_FEAT, N_HID, N_CLS, N_LAYER = 200, 48, 64, 7, 2
    N_EDGES = 600

    x = jax.random.normal(k_x, (N, N_FEAT), jnp.float32)
    src = jax.random.randint(k_e, (N_EDGES,), 0, N)
    dst = jax.random.randint(jax.random.fold_in(k_e, 1), (N_EDGES,), 0, N)
    # undirected (symmetric) edge list, shape [2, 2*N_EDGES]
    edge_index = jnp.stack(
        [jnp.concatenate([src, dst]), jnp.concatenate([dst, src])], axis=0
    ).astype(jnp.int32)
    y = jax.random.randint(k_y, (N,), 0, N_CLS, dtype=jnp.int32)
    mask = jnp.arange(N) < (N // 2)   # train mask on the first half of the nodes

    model = GnnModelPallas(k_p, N_FEAT, N_HID, N_CLS, N_LAYER)

    logits = model.forward(x, edge_index, logit=True)
    loss = model.forward(x, edge_index, y=y, mask=mask, logit=False)
    # uniform class weights must reproduce the unweighted loss
    loss_w = model.forward(x, edge_index, y=y, mask=mask,
                           weight=jnp.ones((N_CLS,), jnp.float32), logit=False)
    jax.block_until_ready((logits, loss, loss_w))

    assert logits.shape == (N, N_CLS)
    assert bool(jnp.isfinite(loss))
    assert abs(float(loss) - float(loss_w)) < 1e-5
    print("KERNEL_OK")
</pallas_src>

<mosaic_0001>
module attributes {stable_mosaic.version = 11 : i64} {
  func.func @fused_gcn_kernel(%arg0: i32, %arg1: memref<256x1xf32, #tpu.memory_space<vmem>>, %arg2: memref<256x1xi32, #tpu.memory_space<vmem>>, %arg3: memref<256x256xbf16, #tpu.memory_space<vmem>>, %arg4: memref<256x128xbf16, #tpu.memory_space<vmem>>, %arg5: memref<1x128xf32, #tpu.memory_space<vmem>>, %arg6: memref<128x128xbf16, #tpu.memory_space<vmem>>, %arg7: memref<1x128xf32, #tpu.memory_space<vmem>>, %arg8: memref<256x128xf32, #tpu.memory_space<vmem>>, %arg9: memref<1x1xf32, #tpu.memory_space<vmem>>, %arg10: memref<256x128xbf16, #tpu.memory_space<vmem>>) attributes {dimension_semantics = [#tpu.dimension_semantics<arbitrary>], iteration_bounds = array<i64: 2>, scalar_prefetch = 0 : i64, scratch_operands = 1 : i64, tpu.core_type = #tpu.core_type<tc>, window_params = [{transform_indices = @transform_0, window_bounds = array<i64: 256, 1>}, {transform_indices = @transform_1, window_bounds = array<i64: 256, 1>}, {transform_indices = @transform_2, window_bounds = array<i64: 256, 256>}, {pipeline_mode = #tpu.pipeline_mode<synchronous>, transform_indices = @transform_3, window_bounds = array<i64: 256, 128>}, {pipeline_mode = #tpu.pipeline_mode<synchronous>, transform_indices = @transform_4, window_bounds = array<i64: 1, 128>}, {pipeline_mode = #tpu.pipeline_mode<synchronous>, transform_indices = @transform_5, window_bounds = array<i64: 128, 128>}, {pipeline_mode = #tpu.pipeline_mode<synchronous>, transform_indices = @transform_6, window_bounds = array<i64: 1, 128>}, {transform_indices = @transform_7, window_bounds = array<i64: 256, 128>}, {pipeline_mode = #tpu.pipeline_mode<synchronous>, transform_indices = @transform_8, window_bounds = array<i64: 1, 1>}]} {
    %c0_i32 = arith.constant 0 : i32
    %0 = arith.cmpi eq, %arg0, %c0_i32 : i32
    %1 = arith.extui %0 : i1 to i32
    %c0_i32_0 = arith.constant 0 : i32
    %2 = arith.cmpi ne, %1, %c0_i32_0 : i32
    scf.if %2 {
      %cst = arith.constant 0.000000e+00 : f32
      %9 = vector.broadcast %cst : f32 to vector<1x1xf32>
      %c0 = arith.constant 0 : index
      %c0_4 = arith.constant 0 : index
      %10 = vector.load %arg9[%c0, %c0_4] : memref<1x1xf32, #tpu.memory_space<vmem>>, vector<1x1xf32>
      tpu.vector_store %arg9[%c0, %c0_4], %9 {strides = array<i32>} : memref<1x1xf32, #tpu.memory_space<vmem>>, vector<1x1xf32>,
    } else {
    }
    %c1_i32 = arith.constant 1 : i32
    %3 = arith.cmpi slt, %arg0, %c1_i32 : i32
    %4 = arith.extui %3 : i1 to i32
    %c0_i32_1 = arith.constant 0 : i32
    %5 = arith.cmpi ne, %4, %c0_i32_1 : i32
    scf.if %5 {
      %c0 = arith.constant 0 : index
      %c0_4 = arith.constant 0 : index
      %9 = vector.load %arg3[%c0, %c0_4] : memref<256x256xbf16, #tpu.memory_space<vmem>>, vector<256x256xbf16>
      %c0_5 = arith.constant 0 : index
      %c0_6 = arith.constant 0 : index
      %10 = vector.load %arg4[%c0_5, %c0_6] : memref<256x128xbf16, #tpu.memory_space<vmem>>, vector<256x128xbf16>
      %cst = arith.constant dense<0.000000e+00> : vector<256x128xf32>
      %11 = tpu.matmul %9, %10, %cst {dimension_numbers = #tpu.dot_dimension_numbers<[1], [0], [0], [1], [0, 0, 1, 1], [], []>} : vector<256x256xbf16>, vector<256x128xbf16>, vector<256x128xf32> -> vector<256x128xf32>
      %c0_7 = arith.constant 0 : index
      %c0_8 = arith.constant 0 : index
      %12 = vector.load %arg5[%c0_7, %c0_8] : memref<1x128xf32, #tpu.memory_space<vmem>>, vector<1x128xf32>
      %13 = vector.broadcast %12 : vector<1x128xf32> to vector<256x128xf32>
      %14 = arith.addf %11, %13 : vector<256x128xf32>
      %cst_9 = arith.constant 0.000000e+00 : f32
      %15 = vector.broadcast %cst_9 : f32 to vector<256x128xf32>
      %16 = arith.maximumf %14, %15 : vector<256x128xf32>
      %17 = arith.truncf %16 : vector<256x128xf32> to vector<256x128xbf16>
      %c0_10 = arith.constant 0 : index
      %c0_11 = arith.constant 0 : index
      %18 = vector.load %arg6[%c0_10, %c0_11] : memref<128x128xbf16, #tpu.memory_space<vmem>>, vector<128x128xbf16>
      %cst_12 = arith.constant dense<0.000000e+00> : vector<256x128xf32>
      %19 = tpu.matmul %17, %18, %cst_12 {dimension_numbers = #tpu.dot_dimension_numbers<[1], [0], [0], [1], [0, 0, 1, 1], [], []>} : vector<256x128xbf16>, vector<128x128xbf16>, vector<256x128xf32> -> vector<256x128xf32>
      %c256_i32 = arith.constant 256 : i32
      %20 = arith.muli %arg0, %c256_i32 : i32
      %21 = tpu.assume_multiple %20, 256 : i32
      %22 = arith.truncf %19 : vector<256x128xf32> to vector<256x128xbf16>
      %23 = arith.index_cast %21 : i32 to index
      %c0_13 = arith.constant 0 : index
      %24 = vector.load %arg10[%23, %c0_13] : memref<256x128xbf16, #tpu.memory_space<vmem>>, vector<256x128xbf16>
      tpu.vector_store %arg10[%23, %c0_13], %22 {strides = array<i32>} : memref<256x128xbf16, #tpu.memory_space<vmem>>, vector<256x128xbf16>,
    } else {
    }
    %c1_i32_2 = arith.constant 1 : i32
    %6 = arith.cmpi sge, %arg0, %c1_i32_2 : i32
    %7 = arith.extui %6 : i1 to i32
    %c0_i32_3 = arith.constant 0 : i32
    %8 = arith.cmpi ne, %7, %c0_i32_3 : i32
    scf.if %8 {
      %c0 = arith.constant 0 : index
      %c0_4 = arith.constant 0 : index
      %9 = vector.load %arg3[%c0, %c0_4] : memref<256x256xbf16, #tpu.memory_space<vmem>>, vector<256x256xbf16>
      %c0_5 = arith.constant 0 : index
      %c0_6 = arith.constant 0 : index
      %10 = vector.load %arg10[%c0_5, %c0_6] : memref<256x128xbf16, #tpu.memory_space<vmem>>, vector<256x128xbf16>
      %cst = arith.constant dense<0.000000e+00> : vector<256x128xf32>
      %11 = tpu.matmul %9, %10, %cst {dimension_numbers = #tpu.dot_dimension_numbers<[1], [0], [0], [1], [0, 0, 1, 1], [], []>} : vector<256x256xbf16>, vector<256x128xbf16>, vector<256x128xf32> -> vector<256x128xf32>
      %c0_7 = arith.constant 0 : index
      %c0_8 = arith.constant 0 : index
      %12 = vector.load %arg7[%c0_7, %c0_8] : memref<1x128xf32, #tpu.memory_space<vmem>>, vector<1x128xf32>
      %13 = vector.broadcast %12 : vector<1x128xf32> to vector<256x128xf32>
      %14 = arith.addf %11, %13 : vector<256x128xf32>
      %15 = tpu.iota {dimensions = array<i32: 1>} : vector<256x128xi32>
      %c7_i32 = arith.constant 7 : i32
      %16 = vector.broadcast %c7_i32 : i32 to vector<256x128xi32>
      %17 = arith.cmpi slt, %15, %16 : vector<256x128xi32>
      %cst_9 = arith.constant -1.000000e+30 : f32
      %18 = vector.broadcast %cst_9 : f32 to vector<256x128xf32>
      %19 = arith.select %17, %14, %18 : vector<256x128xi1>, vector<256x128xf32>
      %c0_10 = arith.constant 0 : index
      %c0_11 = arith.constant 0 : index
      %20 = vector.load %arg8[%c0_10, %c0_11] : memref<256x128xf32, #tpu.memory_space<vmem>>, vector<256x128xf32>
      tpu.vector_store %arg8[%c0_10, %c0_11], %19 {strides = array<i32>} : memref<256x128xf32, #tpu.memory_space<vmem>>, vector<256x128xf32>,
      %cst_12 = arith.constant dense<0xFF800000> : vector<256xf32>
      %21 = vector.multi_reduction <maximumf>, %19, %cst_12 [1] : vector<256x128xf32> to vector<256xf32>
      %22 = vector.shape_cast %21 : vector<256xf32> to vector<256x1xf32>
      %23 = vector.broadcast %22 : vector<256x1xf32> to vector<256x128xf32>
      %24 = arith.subf %19, %23 : vector<256x128xf32>
      %25 = math.exp %24 : vector<256x128xf32>
      %cst_13 = arith.constant dense<0.000000e+00> : vector<256xf32>
      %26 = vector.multi_reduction <add>, %25, %cst_13 [1] : vector<256x128xf32> to vector<256xf32>
      %27 = vector.shape_cast %26 : vector<256xf32> to vector<256x1xf32>
      %28 = math.log %27 : vector<256x1xf32>
      %29 = vector.broadcast %28 : vector<256x1xf32> to vector<256x128xf32>
      %30 = arith.subf %24, %29 : vector<256x128xf32>
      %c0_14 = arith.constant 0 : index
      %c0_15 = arith.constant 0 : index
      %31 = vector.load %arg2[%c0_14, %c0_15] : memref<256x1xi32, #tpu.memory_space<vmem>>, vector<256x1xi32>
      %32 = vector.broadcast %31 : vector<256x1xi32> to vector<256x128xi32>
      %33 = arith.cmpi eq, %15, %32 : vector<256x128xi32>
      %34 = arith.extui %33 : vector<256x128xi1> to vector<256x128xi32>
      %35 = arith.sitofp %34 : vector<256x128xi32> to vector<256x128xf32>
      %c0_16 = arith.constant 0 : index
      %c0_17 = arith.constant 0 : index
      %36 = vector.load %arg9[%c0_16, %c0_17] : memref<1x1xf32, #tpu.memory_space<vmem>>, vector<1x1xf32>
      %c0_18 = arith.constant 0 : index
      %c0_19 = arith.constant 0 : index
      %37 = vector.load %arg1[%c0_18, %c0_19] : memref<256x1xf32, #tpu.memory_space<vmem>>, vector<256x1xf32>
      %38 = vector.broadcast %37 : vector<256x1xf32> to vector<256x128xf32>
      %39 = arith.mulf %38, %35 : vector<256x128xf32>
      %40 = arith.mulf %39, %30 : vector<256x128xf32>
      %41 = vector.shape_cast %40 : vector<256x128xf32> to vector<1x256x128xf32>
      %cst_20 = arith.constant dense<0.000000e+00> : vector<1xf32>
      %42 = vector.multi_reduction <add>, %41, %cst_20 [1, 2] : vector<1x256x128xf32> to vector<1xf32>
      %43 = vector.shape_cast %42 : vector<1xf32> to vector<1x1x1xf32>
      %44 = vector.extract %43[0, 0, 0] : f32 from vector<1x1x1xf32>
      %cst_21 = arith.constant 0.000000e+00 : f32
      %45 = arith.subf %cst_21, %44 : f32
      %46 = vector.broadcast %45 : f32 to vector<1x1xf32>
      %47 = arith.addf %36, %46 : vector<1x1xf32>
      %c0_22 = arith.constant 0 : index
      %c0_23 = arith.constant 0 : index
      %48 = vector.load %arg9[%c0_22, %c0_23] : memref<1x1xf32, #tpu.memory_space<vmem>>, vector<1x1xf32>
      tpu.vector_store %arg9[%c0_22, %c0_23], %47 {strides = array<i32>} : memref<1x1xf32, #tpu.memory_space<vmem>>, vector<1x1xf32>,
    } else {
    }
    return
  }
  func.func @transform_0(%arg0: i32) -> (i32, i32) {
    %c1_i32 = arith.constant 1 : i32
    %0 = arith.cmpi slt, %arg0, %c1_i32 : i32
    %c1_i32_0 = arith.constant 1 : i32
    %1 = arith.subi %arg0, %c1_i32_0 : i32
    %c0_i32 = arith.constant 0 : i32
    %2 = arith.select %0, %c0_i32, %1 : i32
    %c0_i32_1 = arith.constant 0 : i32
    %c0_i32_2 = arith.constant 0 : i32
    return %2, %c0_i32_1 : i32, i32
  }
  func.func @transform_1(%arg0: i32) -> (i32, i32) {
    %c1_i32 = arith.constant 1 : i32
    %0 = arith.cmpi slt, %arg0, %c1_i32 : i32
    %c1_i32_0 = arith.constant 1 : i32
    %1 = arith.subi %arg0, %c1_i32_0 : i32
    %c0_i32 = arith.constant 0 : i32
    %2 = arith.select %0, %c0_i32, %1 : i32
    %c0_i32_1 = arith.constant 0 : i32
    %c0_i32_2 = arith.constant 0 : i32
    return %2, %c0_i32_1 : i32, i32
  }
  func.func @transform_2(%arg0: i32) -> (i32, i32) {
    %c1_i32 = arith.constant 1 : i32
    %c0_i32 = arith.constant 0 : i32
    %0 = arith.cmpi eq, %c1_i32, %c0_i32 : i32
    %c1_i32_0 = arith.constant 1 : i32
    %1 = arith.select %0, %c1_i32_0, %c1_i32 : i32
    %2 = arith.remsi %arg0, %1 : i32
    %c0_i32_1 = arith.constant 0 : i32
    %3 = arith.cmpi ne, %2, %c0_i32_1 : i32
    %c0_i32_2 = arith.constant 0 : i32
    %4 = arith.cmpi slt, %2, %c0_i32_2 : i32
    %c0_i32_3 = arith.constant 0 : i32
    %5 = arith.cmpi slt, %1, %c0_i32_3 : i32
    %6 = arith.xori %4, %5 : i1
    %7 = arith.andi %6, %3 : i1
    %8 = arith.addi %2, %1 : i32
    %9 = arith.select %7, %8, %2 : i32
    %c0_i32_4 = arith.constant 0 : i32
    %c0_i32_5 = arith.constant 0 : i32
    return %9, %c0_i32_4 : i32, i32
  }
  func.func @transform_3(%arg0: i32) -> (i32, i32) {
    %c0_i32 = arith.constant 0 : i32
    %c0_i32_0 = arith.constant 0 : i32
    %c0_i32_1 = arith.constant 0 : i32
    return %c0_i32, %c0_i32_0 : i32, i32
  }
  func.func @transform_4(%arg0: i32) -> (i32, i32) {
    %c0_i32 = arith.constant 0 : i32
    %c0_i32_0 = arith.constant 0 : i32
    %c0_i32_1 = arith.constant 0 : i32
    return %c0_i32, %c0_i32_0 : i32, i32
  }
  func.func @transform_5(%arg0: i32) -> (i32, i32) {
    %c0_i32 = arith.constant 0 : i32
    %c0_i32_0 = arith.constant 0 : i32
    %c0_i32_1 = arith.constant 0 : i32
    return %c0_i32, %c0_i32_0 : i32, i32
  }
  func.func @transform_6(%arg0: i32) -> (i32, i32) {
    %c0_i32 = arith.constant 0 : i32
    %c0_i32_0 = arith.constant 0 : i32
    %c0_i32_1 = arith.constant 0 : i32
    return %c0_i32, %c0_i32_0 : i32, i32
  }
  func.func @transform_7(%arg0: i32) -> (i32, i32) {
    %c1_i32 = arith.constant 1 : i32
    %0 = arith.cmpi slt, %arg0, %c1_i32 : i32
    %c1_i32_0 = arith.constant 1 : i32
    %1 = arith.subi %arg0, %c1_i32_0 : i32
    %c0_i32 = arith.constant 0 : i32
    %2 = arith.select %0, %c0_i32, %1 : i32
    %c0_i32_1 = arith.constant 0 : i32
    %c0_i32_2 = arith.constant 0 : i32
    return %2, %c0_i32_1 : i32, i32
  }
  func.func @transform_8(%arg0: i32) -> (i32, i32) {
    %c0_i32 = arith.constant 0 : i32
    %c0_i32_0 = arith.constant 0 : i32
    %c0_i32_1 = arith.constant 0 : i32
    return %c0_i32, %c0_i32_0 : i32, i32
  }
}

</mosaic_0001>

<llo_original>
// kernel: fused_gcn_forward.1
$region0: #{fused_gcn_forward.1}
  #allocation0 [shape = 'u32[]', space=smem, size = 0x4, offset = 0x4, fixed_abs, tag = 'smem constant byte address 0x4 - core index']
  #allocation1 [shape = 'u32[72,128]{1,0:T(1,128)}', space=vmem, size = 0x9000, scoped, tag = 'internal scratch']
  #allocation2 [shape = 'bf16[256,128]{1,0:T(8,128)(2,1)}', space=vmem, size = 0x10000, scoped, tag = 'scratch operand']
  %s0 = inlined_call_operand.vmem [shape: f32[256,1], index: 0, kind: input, shape index: {}]
  %s1 = inlined_call_operand.vmem [shape: s32[256,1], index: 1, kind: input, shape index: {}]
  %s2 = inlined_call_operand.vmem [shape: bf16[256,256], index: 2, kind: input, shape index: {}]
  %s3 = inlined_call_operand.vmem [shape: bf16[256,128], index: 3, kind: input, shape index: {}]
  %s4 = inlined_call_operand.vmem [shape: f32[1,128], index: 4, kind: input, shape index: {}]
  %s5 = inlined_call_operand.vmem [shape: bf16[128,128], index: 5, kind: input, shape index: {}]
  %s6 = inlined_call_operand.vmem [shape: f32[1,128], index: 6, kind: input, shape index: {}]
  %s7 = inlined_call_operand.hbm [shape: f32[256,128], index: 7, kind: output, shape index: {0}]
  %s8 = inlined_call_operand.hbm [shape: f32[1,1], index: 8, kind: output, shape index: {1}]
  %9 = xla_tuple %s7, %s8
  %s10 = sld [smem:[#allocation0]]
  $region81: #{fused_gcn_forward.1} parent=0
    _
  %s12 = ssub.s32 1, %s10
  %s13 = scalar_select 0, %s12, %s10
  $region1: #{fused_gcn_forward.1} parent=0
    #allocation3 [shape = 'u8[262144]{0}', space=vmem, size = 0x40000, scoped, tag = 'output window, operand 0']
    #allocation4 [shape = 's32[2]{0}', space=sflag, size = 0x8, scoped, tag = 'scoped memory for fused_gcn_forward.1']
    #allocation5 [shape = 'u8[512]{0}', space=vmem, size = 0x400, scoped, tag = 'output window, operand 1, single buffered']
    #allocation6 [shape = 's32[1]{0}', space=sflag, size = 0x4, scoped, tag = 'scoped memory for fused_gcn_forward.1']
    %14 = vsyncpa [#allocation4], 0
    %s15 = scalar_lea.sflag [#allocation4], 1
    %16 = vsyncpa %s15, 0
    %17 = vsyncpa [#allocation6], 0
    loop: start=0, step=1, limit=4
    $region2: #{fused_gcn_forward.1} parent=1 // loop_pre_header
      _
    $region3: #{fused_gcn_forward.1} parent=1 // loop_header
      %s19 = sphi 0, %s23
      %p20 = scmp.ge.s32.totalorder %s19, 4
      %s35 = sphi 0, %s37
      %s38 = sphi 0, %s35
      %s39 = sphi 0, %s38
      %s55 = sphi 0, %s39
      %s67 = sphi 0, %s69
      %s70 = sphi 0, %s67
      %s71 = sphi 0, %s70
      %s87 = sphi 0, %s71
      %s91 = sphi 0, %s91
      %s93 = sphi 0, %s91
      %s94 = sphi 0, %s93
      %s108 = sphi 0, %s94
      %s112 = sphi 0, %s112
      %s114 = sphi 0, %s112
      %s115 = sphi 0, %s114
      %s129 = sphi 0, %s115
      %s133 = sphi 0, %s133
      %s135 = sphi 0, %s133
      %s136 = sphi 0, %s135
      %s150 = sphi 0, %s136
      %s154 = sphi 0, %s154
      %s156 = sphi 0, %s154
      %s157 = sphi 0, %s156
      %s171 = sphi 0, %s157
      %s175 = sphi 0, %s175
      %s177 = sphi 0, %s175
      %s178 = sphi 0, %s177
      %s192 = sphi 0, %s178
      %s204 = sphi 0, %s206
      %s207 = sphi 0, %s204
      %s208 = sphi 0, %s207
      %s224 = sphi 0, %s208
      %s228 = sphi 0, %s228
      %s230 = sphi 0, %s228
      %s231 = sphi 0, %s230
      %s245 = sphi 0, %s231
    $region4: #{fused_gcn_forward.1} parent=1 // loop_header_branch
      %22 = sbr.rel (%p20) target = $region8
    $region5: #{fused_gcn_forward.1} parent=1 // loop_body
      %s24 = ssub.s32 %s19, 1
      %s25 = ssub.s32 %s19, 2
      %s26 = sadd.s32 %s19, 1
      %p27 = scmp.lt.s32.totalorder %s19, 1
      %s28 = ssub.s32 %s19, 1
      %s29 = scalar_select %p27, 0, %s28
      %p30 = scmp.lt.s32.totalorder %s26, 1
      %s31 = ssub.s32 %s26, 1
      %s32 = scalar_select %p30, 0, %s31
      %s33 = ssub.s32 %s29, %s32
      %p34 = scmp.eq.s32.totalorder %s33, 0
      %s36 = sadd.s32 %s35, 1
      %s37 = scalar_select %p34, %s35, %s36
      %p40 = pneg %p34
      %p41 = scmp.eq.s32.totalorder %s19, 1
      %p42 = por %p40, %p41
      %p43 = scmp.ne.s32.totalorder %s35, %s38
      %p44 = scmp.eq.s32.totalorder %s19, 0
      %p45 = por %p43, %p44
      %p46 = scmp.ne.s32.totalorder %s35, %s38
      %p47 = scmp.eq.s32.totalorder %s24, 1
      %p48 = por %p46, %p47
      %p49 = scmp.ne.s32.totalorder %s38, %s39
      %p50 = scmp.eq.s32.totalorder %s24, 0
      %p51 = por %p49, %p50
      %p52 = scmp.ne.s32.totalorder %s38, %s39
      %p53 = scmp.eq.s32.totalorder %s25, 1
      %p54 = por %p52, %p53
      %p56 = scmp.ne.s32.totalorder %s39, %s55
      %p57 = scmp.eq.s32.totalorder %s25, 0
      %p58 = por %p56, %p57
      %p59 = scmp.lt.s32.totalorder %s19, 1
      %s60 = ssub.s32 %s19, 1
      %s61 = scalar_select %p59, 0, %s60
      %p62 = scmp.lt.s32.totalorder %s26, 1
      %s63 = ssub.s32 %s26, 1
      %s64 = scalar_select %p62, 0, %s63
      %s65 = ssub.s32 %s61, %s64
      %p66 = scmp.eq.s32.totalorder %s65, 0
      %s68 = sadd.s32 %s67, 1
      %s69 = scalar_select %p66, %s67, %s68
      %p72 = pneg %p66
      %p73 = scmp.eq.s32.totalorder %s19, 1
      %p74 = por %p72, %p73
      %p75 = scmp.ne.s32.totalorder %s67, %s70
      %p76 = scmp.eq.s32.totalorder %s19, 0
      %p77 = por %p75, %p76
      %p78 = scmp.ne.s32.totalorder %s67, %s70
      %p79 = scmp.eq.s32.totalorder %s24, 1
      %p80 = por %p78, %p79
      %p81 = scmp.ne.s32.totalorder %s70, %s71
      %p82 = scmp.eq.s32.totalorder %s24, 0
      %p83 = por %p81, %p82
      %p84 = scmp.ne.s32.totalorder %s70, %s71
      %p85 = scmp.eq.s32.totalorder %s25, 1
      %p86 = por %p84, %p85
      %p88 = scmp.ne.s32.totalorder %s71, %s87
      %p89 = scmp.eq.s32.totalorder %s25, 0
      %p90 = por %p88, %p89
      %s92 = sadd.s32 %s91, 1
      %p95 = scmp.eq.s32.totalorder %s19, 1
      %p96 = scmp.ne.s32.totalorder %s91, %s93
      %p97 = scmp.eq.s32.totalorder %s19, 0
      %p98 = por %p96, %p97
      %p99 = scmp.ne.s32.totalorder %s91, %s93
      %p100 = scmp.eq.s32.totalorder %s24, 1
      %p101 = por %p99, %p100
      %p102 = scmp.ne.s32.totalorder %s93, %s94
      %p103 = scmp.eq.s32.totalorder %s24, 0
      %p104 = por %p102, %p103
      %p105 = scmp.ne.s32.totalorder %s93, %s94
      %p106 = scmp.eq.s32.totalorder %s25, 1
      %p107 = por %p105, %p106
      %p109 = scmp.ne.s32.totalorder %s94, %s108
      %p110 = scmp.eq.s32.totalorder %s25, 0
      %p111 = por %p109, %p110
      %s113 = sadd.s32 %s112, 1
      %p116 = scmp.eq.s32.totalorder %s19, 1
      %p117 = scmp.ne.s32.totalorder %s112, %s114
      %p118 = scmp.eq.s32.totalorder %s19, 0
      %p119 = por %p117, %p118
      %p120 = scmp.ne.s32.totalorder %s112, %s114
      %p121 = scmp.eq.s32.totalorder %s24, 1
      %p122 = por %p120, %p121
      %p123 = scmp.ne.s32.totalorder %s114, %s115
      %p124 = scmp.eq.s32.totalorder %s24, 0
      %p125 = por %p123, %p124
      %p126 = scmp.ne.s32.totalorder %s114, %s115
      %p127 = scmp.eq.s32.totalorder %s25, 1
      %p128 = por %p126, %p127
      %p130 = scmp.ne.s32.totalorder %s115, %s129
      %p131 = scmp.eq.s32.totalorder %s25, 0
      %p132 = por %p130, %p131
      %s134 = sadd.s32 %s133, 1
      %p137 = scmp.eq.s32.totalorder %s19, 1
      %p138 = scmp.ne.s32.totalorder %s133, %s135
      %p139 = scmp.eq.s32.totalorder %s19, 0
      %p140 = por %p138, %p139
      %p141 = scmp.ne.s32.totalorder %s133, %s135
      %p142 = scmp.eq.s32.totalorder %s24, 1
      %p143 = por %p141, %p142
      %p144 = scmp.ne.s32.totalorder %s135, %s136
      %p145 = scmp.eq.s32.totalorder %s24, 0
      %p146 = por %p144, %p145
      %p147 = scmp.ne.s32.totalorder %s135, %s136
      %p148 = scmp.eq.s32.totalorder %s25, 1
      %p149 = por %p147, %p148
      %p151 = scmp.ne.s32.totalorder %s136, %s150
      %p152 = scmp.eq.s32.totalorder %s25, 0
      %p153 = por %p151, %p152
      %s155 = sadd.s32 %s154, 1
      %p158 = scmp.eq.s32.totalorder %s19, 1
      %p159 = scmp.ne.s32.totalorder %s154, %s156
      %p160 = scmp.eq.s32.totalorder %s19, 0
      %p161 = por %p159, %p160
      %p162 = scmp.ne.s32.totalorder %s154, %s156
      %p163 = scmp.eq.s32.totalorder %s24, 1
      %p164 = por %p162, %p163
      %p165 = scmp.ne.s32.totalorder %s156, %s157
      %p166 = scmp.eq.s32.totalorder %s24, 0
      %p167 = por %p165, %p166
      %p168 = scmp.ne.s32.totalorder %s156, %s157
      %p169 = scmp.eq.s32.totalorder %s25, 1
      %p170 = por %p168, %p169
      %p172 = scmp.ne.s32.totalorder %s157, %s171
      %p173 = scmp.eq.s32.totalorder %s25, 0
      %p174 = por %p172, %p173
      %s176 = sadd.s32 %s175, 1
      %p179 = scmp.eq.s32.totalorder %s19, 1
      %p180 = scmp.ne.s32.totalorder %s175, %s177
      %p181 = scmp.eq.s32.totalorder %s19, 0
      %p182 = por %p180, %p181
      %p183 = scmp.ne.s32.totalorder %s175, %s177
      %p184 = scmp.eq.s32.totalorder %s24, 1
      %p185 = por %p183, %p184
      %p186 = scmp.ne.s32.totalorder %s177, %s178
      %p187 = scmp.eq.s32.totalorder %s24, 0
      %p188 = por %p186, %p187
      %p189 = scmp.ne.s32.totalorder %s177, %s178
      %p190 = scmp.eq.s32.totalorder %s25, 1
      %p191 = por %p189, %p190
      %p193 = scmp.ne.s32.totalorder %s178, %s192
      %p194 = scmp.eq.s32.totalorder %s25, 0
      %p195 = por %p193, %p194
      %p196 = scmp.lt.s32.totalorder %s19, 1
      %s197 = ssub.s32 %s19, 1
      %s198 = scalar_select %p196, 0, %s197
      %p199 = scmp.lt.s32.totalorder %s26, 1
      %s200 = ssub.s32 %s26, 1
      %s201 = scalar_select %p199, 0, %s200
      %s202 = ssub.s32 %s198, %s201
      %p203 = scmp.eq.s32.totalorder %s202, 0
      %s205 = sadd.s32 %s204, 1
      %s206 = scalar_select %p203, %s204, %s205
      %p209 = pneg %p203
      %p210 = scmp.eq.s32.totalorder %s19, 1
      %p211 = por %p209, %p210
      %p212 = scmp.ne.s32.totalorder %s204, %s207
      %p213 = scmp.eq.s32.totalorder %s19, 0
      %p214 = por %p212, %p213
      %p215 = scmp.ne.s32.totalorder %s204, %s207
      %p216 = scmp.eq.s32.totalorder %s24, 1
      %p217 = por %p215, %p216
      %p218 = scmp.ne.s32.totalorder %s207, %s208
      %p219 = scmp.eq.s32.totalorder %s24, 0
      %p220 = por %p218, %p219
      %p221 = scmp.ne.s32.totalorder %s207, %s208
      %p222 = scmp.eq.s32.totalorder %s25, 1
      %p223 = por %p221, %p222
      %p225 = scmp.ne.s32.totalorder %s208, %s224
      %p226 = scmp.eq.s32.totalorder %s25, 0
      %p227 = por %p225, %p226
      %s229 = sadd.s32 %s228, 1
      %p232 = scmp.eq.s32.totalorder %s19, 1
      %p233 = scmp.ne.s32.totalorder %s228, %s230
      %p234 = scmp.eq.s32.totalorder %s19, 0
      %p235 = por %p233, %p234
      %p236 = scmp.ne.s32.totalorder %s228, %s230
      %p237 = scmp.eq.s32.totalorder %s24, 1
      %p238 = por %p236, %p237
      %p239 = scmp.ne.s32.totalorder %s230, %s231
      %p240 = scmp.eq.s32.totalorder %s24, 0
      %p241 = por %p239, %p240
      %p242 = scmp.ne.s32.totalorder %s230, %s231
      %p243 = scmp.eq.s32.totalorder %s25, 1
      %p244 = por %p242, %p243
      %p246 = scmp.ne.s32.totalorder %s231, %s245
      %p247 = scmp.eq.s32.totalorder %s25, 0
      %p248 = por %p246, %p247
      %p249 = scmp.le.s32.totalorder 1, %s19
      %p250 = scmp.lt.s32.totalorder %s19, 3
      %p251 = pnand %p249, %p250
      %p252 = pneg %p251
      // Predicated region
      $region9: #{fused_gcn_forward.1} parent=5 // pred_check
        _
      $region10: #{fused_gcn_forward.1} parent=5 // pred_check_branch
        %254 = sbr.rel (%p251) target = $region12
      $region11: #{fused_gcn_forward.1} parent=5 // pred_region
        %s255 = ssub.s32 %s19, 1
        // Predicated region
        $region13: #{fused_gcn_forward.1} parent=11 // pred_check
          %p256 = pneg %p104
        $region14: #{fused_gcn_forward.1} parent=11 // pred_check_branch
          %258 = sbr.rel (%p256) target = $region16
        $region15: #{fused_gcn_forward.1} parent=11 // pred_region
          _
        $region16: #{fused_gcn_forward.1} parent=11 // pred_fallthru
          _
        // Predicated region
        $region17: #{fused_gcn_forward.1} parent=11 // pred_check
          %p259 = pneg %p125
        $region18: #{fused_gcn_forward.1} parent=11 // pred_check_branch
          %261 = sbr.rel (%p259) target = $region20
        $region19: #{fused_gcn_forward.1} parent=11 // pred_region
          _
        $region20: #{fused_gcn_forward.1} parent=11 // pred_fallthru
          _
        // Predicated region
        $region21: #{fused_gcn_forward.1} parent=11 // pred_check
          %p262 = pneg %p146
        $region22: #{fused_gcn_forward.1} parent=11 // pred_check_branch
          %264 = sbr.rel (%p262) target = $region24
        $region23: #{fused_gcn_forward.1} parent=11 // pred_region
          _
        $region24: #{fused_gcn_forward.1} parent=11 // pred_fallthru
          _
        // Predicated region
        $region25: #{fused_gcn_forward.1} parent=11 // pred_check
          %p265 = pneg %p167
        $region26: #{fused_gcn_forward.1} parent=11 // pred_check_branch
          %267 = sbr.rel (%p265) target = $region28
        $region27: #{fused_gcn_forward.1} parent=11 // pred_region
          _
        $region28: #{fused_gcn_forward.1} parent=11 // pred_fallthru
          _
        // Predicated region
        $region29: #{fused_gcn_forward.1} parent=11 // pred_check
          %p268 = pneg %p188
        $region30: #{fused_gcn_forward.1} parent=11 // pred_check_branch
          %270 = sbr.rel (%p268) target = $region32
        $region31: #{fused_gcn_forward.1} parent=11 // pred_region
          _
        $region32: #{fused_gcn_forward.1} parent=11 // pred_fallthru
          _
      $region12: #{fused_gcn_forward.1} parent=5 // pred_fallthru
        _
      %p271 = scmp.lt.s32.totalorder %s19, 2
      // Predicated region
      $region33: #{fused_gcn_forward.1} parent=5 // pred_check
        %p272 = pneg %p271
      $region34: #{fused_gcn_forward.1} parent=5 // pred_check_branch
        %274 = sbr.rel (%p272) target = $region36
      $region35: #{fused_gcn_forward.1} parent=5 // pred_region
        // Predicated region
        $region37: #{fused_gcn_forward.1} parent=35 // pred_check
          %p275 = pneg %p45
        $region38: #{fused_gcn_forward.1} parent=35 // pred_check_branch
          %277 = sbr.rel (%p275) target = $region40
        $region39: #{fused_gcn_forward.1} parent=35 // pred_region
          %p278 = scmp.lt.s32.totalorder %s19, 1
          %s279 = ssub.s32 %s19, 1
          %s280 = scalar_select %p278, 0, %s279
          %s281 = smul.u32 32, %s280
          %p282 = scmp.lt.s32.totalorder %s281, 31
          %s283 = scalar_select %p282, %s281, 31
          %s284 = smul.addr %s283, 8
          %s285 = scalar_lea.vmem %s0, %s284
          %p286 = scmp.lt.s32.totalorder %s19, 1
          %s287 = ssub.s32 %s19, 1
          %s288 = scalar_select %p286, 0, %s287
          %s289 = smul.u32 32, %s288
        $region40: #{fused_gcn_forward.1} parent=35 // pred_fallthru
          _
        // Predicated region
        $region41: #{fused_gcn_forward.1} parent=35 // pred_check
          %p290 = pneg %p77
        $region42: #{fused_gcn_forward.1} parent=35 // pred_check_branch
          %292 = sbr.rel (%p290) target = $region44
        $region43: #{fused_gcn_forward.1} parent=35 // pred_region
          %p293 = scmp.lt.s32.totalorder %s19, 1
          %s294 = ssub.s32 %s19, 1
          %s295 = scalar_select %p293, 0, %s294
          %s296 = smul.u32 32, %s295
          %p297 = scmp.lt.s32.totalorder %s296, 31
          %s298 = scalar_select %p297, %s296, 31
          %s299 = smul.addr %s298, 8
          %s300 = scalar_lea.vmem %s1, %s299
          %p301 = scmp.lt.s32.totalorder %s19, 1
          %s302 = ssub.s32 %s19, 1
          %s303 = scalar_select %p301, 0, %s302
          %s304 = smul.u32 32, %s303
        $region44: #{fused_gcn_forward.1} parent=35 // pred_fallthru
          _
      $region36: #{fused_gcn_forward.1} parent=5 // pred_fallthru
        _
      %p305 = scmp.le.s32.totalorder 1, %s19
      %p306 = scmp.lt.s32.totalorder %s19, 3
      %p307 = pnand %p305, %p306
      %p308 = pneg %p307
      // Predicated region
      $region45: #{fused_gcn_forward.1} parent=5 // pred_check
        _
      $region46: #{fused_gcn_forward.1} parent=5 // pred_check_branch
        %310 = sbr.rel (%p307) target = $region48
      $region47: #{fused_gcn_forward.1} parent=5 // pred_region
        %s311 = ssub.s32 %s19, 1
        %p312 = scmp.lt.s32.totalorder %s24, 1
        %s313 = ssub.s32 %s24, 1
        %s314 = scalar_select %p312, 0, %s313
        %s315 = smul.u32 32, %s314
        %p316 = scmp.lt.s32.totalorder %s315, 31
        %s317 = scalar_select %p316, %s315, 31
        %s318 = smul.addr %s317, 8
        %s319 = scalar_lea.vmem %s0, %s318
        %p320 = pneg %p51
        %p321 = pneg %p48
        %p322 = scmp.lt.s32.totalorder %s24, 1
        %s323 = ssub.s32 %s24, 1
        %s324 = scalar_select %p322, 0, %s323
        %s325 = smul.u32 32, %s324
        %p326 = scmp.lt.s32.totalorder %s325, 31
        %s327 = scalar_select %p326, %s325, 31
        %s328 = smul.addr %s327, 8
        %s329 = scalar_lea.vmem %s1, %s328
        %p330 = pneg %p83
        %p331 = pneg %p80
        %p332 = pneg %p104
        %p333 = pneg %p101
        %p334 = pneg %p125
        %p335 = pneg %p122
        %p336 = pneg %p146
        %p337 = pneg %p143
        %p338 = pneg %p167
        %p339 = pneg %p164
        %p340 = pneg %p188
        %p341 = pneg %p185
        %p342 = pneg %p220
        %p343 = pneg %p217
        %s344 = sand.u32 %s207, 1
        %s345 = scalar_lea.sflag [#allocation4], %s344
        %s346 = sand.u32 %s207, 1
        %s347 = smul.addr %s346, 256
        %s348 = scalar_lea.vmem [#allocation3], %s347
        %p349 = pneg %p241
        %p350 = pneg %p238
        %p351 = scmp.lt.s32.totalorder %s24, 1
        %s352 = ssub.s32 %s24, 1
        %s353 = scalar_select %p351, 0, %s352
        %s354 = smul.u32 32, %s353
        %p355 = scmp.lt.s32.totalorder %s354, 31
        %s356 = scalar_select %p355, %s354, 31
        %s357 = smul.addr %s356, 8
        %s358 = scalar_lea.vmem %s0, %s357
        %p359 = scmp.lt.s32.totalorder %s24, 1
        %s360 = ssub.s32 %s24, 1
        %s361 = scalar_select %p359, 0, %s360
        %s362 = smul.u32 32, %s361
        %p363 = scmp.lt.s32.totalorder %s24, 1
        %s364 = ssub.s32 %s24, 1
        %s365 = scalar_select %p363, 0, %s364
        %s366 = smul.u32 32, %s365
        %p367 = scmp.lt.s32.totalorder %s366, 31
        %s368 = scalar_select %p367, %s366, 31
        %s369 = smul.addr %s368, 8
        %s370 = scalar_lea.vmem %s1, %s369
        %p371 = scmp.lt.s32.totalorder %s24, 1
        %s372 = ssub.s32 %s24, 1
        %s373 = scalar_select %p371, 0, %s372
        %s374 = smul.u32 32, %s373
        %p375 = scmp.lt.s32.totalorder %s24, 1
        %s376 = ssub.s32 %s24, 1
        %s377 = scalar_select %p375, 0, %s376
        %s378 = smul.u32 32, %s377
        %p379 = scmp.eq.s32.totalorder %s24, 0
        // Predicated region
        $region49: #{fused_gcn_forward.1} parent=47 // pred_check
          %p380 = pneg %p379
        $region50: #{fused_gcn_forward.1} parent=47 // pred_check_branch
          %382 = sbr.rel (%p380) target = $region52
        $region51: #{fused_gcn_forward.1} parent=47 // pred_region
          %vm383 = vcmask 0
          %384 = vst.msk [vmem:[#allocation5] sm:$0x1] %vm383, 0.0
        $region52: #{fused_gcn_forward.1} parent=47 // pred_fallthru
          _
        %p385 = scmp.lt.s32.totalorder %s24, 1
        // Predicated region
        $region53: #{fused_gcn_forward.1} parent=47 // pred_check
          %p386 = pneg %p385
        $region54: #{fused_gcn_forward.1} parent=47 // pred_check_branch
          %388 = sbr.rel (%p386) target = $region56
        $region55: #{fused_gcn_forward.1} parent=47 // pred_region
          %v389 = vld [vmem:[%s2] sm:$0xff]
          %v390 = vld [vmem:[%s2 + $0x8] sm:$0xff]
          %v391 = vld [vmem:[%s2 + $0x10] sm:$0xff]
          %v392 = vld [vmem:[%s2 + $0x18] sm:$0xff]
          %v393 = vld [vmem:[%s2 + $0x20] sm:$0xff]
          %v394 = vld [vmem:[%s2 + $0x28] sm:$0xff]
          %v395 = vld [vmem:[%s2 + $0x30] sm:$0xff]
          %v396 = vld [vmem:[%s2 + $0x38] sm:$0xff]
          %v397 = vld [vmem:[%s2 + $0x40] sm:$0xff]
          %v398 = vld [vmem:[%s2 + $0x48] sm:$0xff]
          %v399 = vld [vmem:[%s2 + $0x50] sm:$0xff]
          %v400 = vld [vmem:[%s2 + $0x58] sm:$0xff]
          %v401 = vld [vmem:[%s2 + $0x60] sm:$0xff]
          %v402 = vld [vmem:[%s2 + $0x68] sm:$0xff]
          %v403 = vld [vmem:[%s2 + $0x70] sm:$0xff]
          %v404 = vld [vmem:[%s2 + $0x78] sm:$0xff]
          %v405 = vld [vmem:[%s2 + $0x80] sm:$0xff]
          %v406 = vld [vmem:[%s2 + $0x88] sm:$0xff]
          %v407 = vld [vmem:[%s2 + $0x90] sm:$0xff]
          %v408 = vld [vmem:[%s2 + $0x98] sm:$0xff]
          %v409 = vld [vmem:[%s2 + $0xa0] sm:$0xff]
          %v410 = vld [vmem:[%s2 + $0xa8] sm:$0xff]
          %v411 = vld [vmem:[%s2 + $0xb0] sm:$0xff]
          %v412 = vld [vmem:[%s2 + $0xb8] sm:$0xff]
          %v413 = vld [vmem:[%s2 + $0xc0] sm:$0xff]
          %v414 = vld [vmem:[%s2 + $0xc8] sm:$0xff]
          %v415 = vld [vmem:[%s2 + $0xd0] sm:$0xff]
          %v416 = vld [vmem:[%s2 + $0xd8] sm:$0xff]
          %v417 = vld [vmem:[%s2 + $0xe0] sm:$0xff]
          %v418 = vld [vmem:[%s2 + $0xe8] sm:$0xff]
          %v419 = vld [vmem:[%s2 + $0xf0] sm:$0xff]
          %v420 = vld [vmem:[%s2 + $0xf8] sm:$0xff]
          %v421 = vld [vmem:[%s3] sm:$0xf]
          %v422 = vld [vmem:[%s3 + $0x4] sm:$0xf]
          %v423 = vld [vmem:[%s3 + $0x8] sm:$0xf]
          %v424 = vld [vmem:[%s3 + $0xc] sm:$0xf]
          %v425 = vld [vmem:[%s3 + $0x10] sm:$0xf]
          %v426 = vld [vmem:[%s3 + $0x14] sm:$0xf]
          %v427 = vld [vmem:[%s3 + $0x18] sm:$0xf]
          %v428 = vld [vmem:[%s3 + $0x1c] sm:$0xf]
          %v429 = vld [vmem:[%s3 + $0x20] sm:$0xf]
          %v430 = vld [vmem:[%s3 + $0x24] sm:$0xf]
          %v431 = vld [vmem:[%s3 + $0x28] sm:$0xf]
          %v432 = vld [vmem:[%s3 + $0x2c] sm:$0xf]
          %v433 = vld [vmem:[%s3 + $0x30] sm:$0xf]
          %v434 = vld [vmem:[%s3 + $0x34] sm:$0xf]
          %v435 = vld [vmem:[%s3 + $0x38] sm:$0xf]
          %v436 = vld [vmem:[%s3 + $0x3c] sm:$0xf]
          %v437 = vld [vmem:[%s3 + $0x40] sm:$0xf]
          %v438 = vld [vmem:[%s3 + $0x44] sm:$0xf]
          %v439 = vld [vmem:[%s3 + $0x48] sm:$0xf]
          %v440 = vld [vmem:[%s3 + $0x4c] sm:$0xf]
          %v441 = vld [vmem:[%s3 + $0x50] sm:$0xf]
          %v442 = vld [vmem:[%s3 + $0x54] sm:$0xf]
          %v443 = vld [vmem:[%s3 + $0x58] sm:$0xf]
          %v444 = vld [vmem:[%s3 + $0x5c] sm:$0xf]
          %v445 = vld [vmem:[%s3 + $0x60] sm:$0xf]
          %v446 = vld [vmem:[%s3 + $0x64] sm:$0xf]
          %v447 = vld [vmem:[%s3 + $0x68] sm:$0xf]
          %v448 = vld [vmem:[%s3 + $0x6c] sm:$0xf]
          %v449 = vld [vmem:[%s3 + $0x70] sm:$0xf]
          %v450 = vld [vmem:[%s3 + $0x74] sm:$0xf]
          %v451 = vld [vmem:[%s3 + $0x78] sm:$0xf]
          %v452 = vld [vmem:[%s3 + $0x7c] sm:$0xf]
          %v453 = vld [vmem:[%s4] sm:$0x1]
          %v455 = vperm.slane %v453, 0
          %v489 = vunpack.c.l.b16 %v389
          %v490 = vunpack.c.h.b16 %v389
          %v491 = vunpack.c.l.b16 %v390
          %v492 = vunpack.c.h.b16 %v390
          %v493 = vunpack.c.l.b16 %v391
          %v494 = vunpack.c.h.b16 %v391
          %v495 = vunpack.c.l.b16 %v392
          %v496 = vunpack.c.h.b16 %v392
          %v497 = vunpack.c.l.b16 %v393
          %v498 = vunpack.c.h.b16 %v393
          %v499 = vunpack.c.l.b16 %v394
          %v500 = vunpack.c.h.b16 %v394
          %v501 = vunpack.c.l.b16 %v395
          %v502 = vunpack.c.h.b16 %v395
          %v503 = vunpack.c.l.b16 %v396
          %v504 = vunpack.c.h.b16 %v396
          %v505 = vunpack.c.l.b16 %v397
          %v506 = vunpack.c.h.b16 %v397
          %v507 = vunpack.c.l.b16 %v398
          %v508 = vunpack.c.h.b16 %v398
          %v509 = vunpack.c.l.b16 %v399
          %v510 = vunpack.c.h.b16 %v399
          %v511 = vunpack.c.l.b16 %v400
          %v512 = vunpack.c.h.b16 %v400
          %v513 = vunpack.c.l.b16 %v401
          %v514 = vunpack.c.h.b16 %v401
          %v515 = vunpack.c.l.b16 %v402
          %v516 = vunpack.c.h.b16 %v402
          %v517 = vunpack.c.l.b16 %v403
          %v518 = vunpack.c.h.b16 %v403
          %v519 = vunpack.c.l.b16 %v404
          %v520 = vunpack.c.h.b16 %v404
          %v521 = vunpack.c.l.b16 %v405
          %v522 = vunpack.c.h.b16 %v405
          %v523 = vunpack.c.l.b16 %v406
          %v524 = vunpack.c.h.b16 %v406
          %v525 = vunpack.c.l.b16 %v407
          %v526 = vunpack.c.h.b16 %v407
          %v527 = vunpack.c.l.b16 %v408
          %v528 = vunpack.c.h.b16 %v408
          %v529 = vunpack.c.l.b16 %v409
          %v530 = vunpack.c.h.b16 %v409
          %v531 = vunpack.c.l.b16 %v410
          %v532 = vunpack.c.h.b16 %v410
          %v533 = vunpack.c.l.b16 %v411
          %v534 = vunpack.c.h.b16 %v411
          %v535 = vunpack.c.l.b16 %v412
          %v536 = vunpack.c.h.b16 %v412
          %v537 = vunpack.c.l.b16 %v413
          %v538 = vunpack.c.h.b16 %v413
          %v539 = vunpack.c.l.b16 %v414
          %v540 = vunpack.c.h.b16 %v414
          %v541 = vunpack.c.l.b16 %v415
          %v542 = vunpack.c.h.b16 %v415
          %v543 = vunpack.c.l.b16 %v416
          %v544 = vunpack.c.h.b16 %v416
          %v545 = vunpack.c.l.b16 %v417
          %v546 = vunpack.c.h.b16 %v417
          %v547 = vunpack.c.l.b16 %v418
          %v548 = vunpack.c.h.b16 %v418
          %v549 = vunpack.c.l.b16 %v419
          %v550 = vunpack.c.h.b16 %v419
          %v551 = vunpack.c.l.b16 %v420
          %v552 = vunpack.c.h.b16 %v420
          %v553 = vpack.c.b16 %v491, %v489
          %v554 = vpack.c.b16 %v492, %v490
          %v555 = vpack.c.b16 %v495, %v493
          %v556 = vpack.c.b16 %v496, %v494
          %v557 = vpack.c.b16 %v499, %v497
          %v558 = vpack.c.b16 %v500, %v498
          %v559 = vpack.c.b16 %v503, %v501
          %v560 = vpack.c.b16 %v504, %v502
          %v561 = vpack.c.b16 %v507, %v505
          %v562 = vpack.c.b16 %v508, %v506
          %v563 = vpack.c.b16 %v511, %v509
          %v564 = vpack.c.b16 %v512, %v510
          %v565 = vpack.c.b16 %v515, %v513
          %v566 = vpack.c.b16 %v516, %v514
          %v567 = vpack.c.b16 %v519, %v517
          %v568 = vpack.c.b16 %v520, %v518
          %v569 = vpack.c.b16 %v523, %v521
          %v570 = vpack.c.b16 %v524, %v522
          %v571 = vpack.c.b16 %v527, %v525
          %v572 = vpack.c.b16 %v528, %v526
          %v573 = vpack.c.b16 %v531, %v529
          %v574 = vpack.c.b16 %v532, %v530
          %v575 = vpack.c.b16 %v535, %v533
          %v576 = vpack.c.b16 %v536, %v534
          %v577 = vpack.c.b16 %v539, %v537
          %v578 = vpack.c.b16 %v540, %v538
          %v579 = vpack.c.b16 %v543, %v541
          %v580 = vpack.c.b16 %v544, %v542
          %v581 = vpack.c.b16 %v547, %v545
          %v582 = vpack.c.b16 %v548, %v546
          %v583 = vpack.c.b16 %v551, %v549
          %v584 = vpack.c.b16 %v552, %v550
          %v649 = vunpack.c.l.b16 %v421
          %v650 = vunpack.c.l.b16 %v422
          %v651 = vunpack.c.l.b16 %v423
          %v652 = vunpack.c.l.b16 %v424
          %v653 = vunpack.c.l.b16 %v425
          %v654 = vunpack.c.l.b16 %v426
          %v655 = vunpack.c.l.b16 %v427
          %v656 = vunpack.c.l.b16 %v428
          %v657 = vunpack.c.l.b16 %v429
          %v658 = vunpack.c.l.b16 %v430
          %v659 = vunpack.c.l.b16 %v431
          %v660 = vunpack.c.l.b16 %v432
          %v661 = vunpack.c.l.b16 %v433
          %v662 = vunpack.c.l.b16 %v434
          %v663 = vunpack.c.l.b16 %v435
          %v664 = vunpack.c.l.b16 %v436
          %v665 = vunpack.c.l.b16 %v437
          %v666 = vunpack.c.l.b16 %v438
          %v667 = vunpack.c.l.b16 %v439
          %v668 = vunpack.c.l.b16 %v440
          %v669 = vunpack.c.l.b16 %v441
          %v670 = vunpack.c.l.b16 %v442
          %v671 = vunpack.c.l.b16 %v443
          %v672 = vunpack.c.l.b16 %v444
          %v673 = vunpack.c.l.b16 %v445
          %v674 = vunpack.c.l.b16 %v446
          %v675 = vunpack.c.l.b16 %v447
          %v676 = vunpack.c.l.b16 %v448
          %v677 = vunpack.c.l.b16 %v449
          %v678 = vunpack.c.l.b16 %v450
          %v679 = vunpack.c.l.b16 %v451
          %v680 = vunpack.c.l.b16 %v452
          %v681 = vpack.c.b16 %v650, %v649
          %v682 = vpack.c.b16 %v652, %v651
          %v683 = vpack.c.b16 %v654, %v653
          %v684 = vpack.c.b16 %v656, %v655
          %v685 = vpack.c.b16 %v658, %v657
          %v686 = vpack.c.b16 %v660, %v659
          %v687 = vpack.c.b16 %v662, %v661
          %v688 = vpack.c.b16 %v664, %v663
          %v689 = vpack.c.b16 %v666, %v665
          %v690 = vpack.c.b16 %v668, %v667
          %v691 = vpack.c.b16 %v670, %v669
          %v692 = vpack.c.b16 %v672, %v671
          %v693 = vpack.c.b16 %v674, %v673
          %v694 = vpack.c.b16 %v676, %v675
          %v695 = vpack.c.b16 %v678, %v677
          %v696 = vpack.c.b16 %v680, %v679
          %713 = vmatpush.bf16.msra.mxu0 %v688
          %714 = vmatpush.bf16.msra.mxu0 %v687
          %715 = vmatpush.bf16.msra.mxu0 %v686
          %716 = vmatpush.bf16.msra.mxu0 %v685
          %717 = vmatpush.bf16.msra.mxu0 %v684
          %718 = vmatpush.bf16.msra.mxu0 %v683
          %719 = vmatpush.bf16.msra.mxu0 %v682
          %720 = vmatpush.bf16.msra.mxu0 %v681
          %721 = vmatmul.bf16.gmra.mxu0 %v553
          %v722 = vpop.f32.mrf.mxu0
          %v723 = vadd.f32 %v455, %v722
          %v724 = vpop.f32.mrf.mxu0
          %v725 = vadd.f32 %v455, %v724
          %726 = vmatmul.bf16.gmra.mxu0 %v555
          %v727 = vpop.f32.mrf.mxu0
          %v728 = vadd.f32 %v455, %v727
          %v729 = vpop.f32.mrf.mxu0
          %v730 = vadd.f32 %v455, %v729
          %731 = vmatmul.bf16.gmra.mxu0 %v557
          %v732 = vpop.f32.mrf.mxu0
          %v733 = vadd.f32 %v455, %v732
          %v734 = vpop.f32.mrf.mxu0
          %v735 = vadd.f32 %v455, %v734
          %736 = vmatmul.bf16.gmra.mxu0 %v559
          %v737 = vpop.f32.mrf.mxu0
          %v738 = vadd.f32 %v455, %v737
          %v739 = vpop.f32.mrf.mxu0
          %v740 = vadd.f32 %v455, %v739
          %741 = vmatmul.bf16.gmra.mxu0 %v561
          %v742 = vpop.f32.mrf.mxu0
          %v743 = vadd.f32 %v455, %v742
          %v744 = vpop.f32.mrf.mxu0
          %v745 = vadd.f32 %v455, %v744
          %746 = vmatmul.bf16.gmra.mxu0 %v563
          %v747 = vpop.f32.mrf.mxu0
          %v748 = vadd.f32 %v455, %v747
          %v749 = vpop.f32.mrf.mxu0
          %v750 = vadd.f32 %v455, %v749
          %751 = vmatmul.bf16.gmra.mxu0 %v565
          %v752 = vpop.f32.mrf.mxu0
          %v753 = vadd.f32 %v455, %v752
          %v754 = vpop.f32.mrf.mxu0
          %v755 = vadd.f32 %v455, %v754
          %756 = vmatmul.bf16.gmra.mxu0 %v567
          %v757 = vpop.f32.mrf.mxu0
          %v758 = vadd.f32 %v455, %v757
          %v759 = vpop.f32.mrf.mxu0
          %v760 = vadd.f32 %v455, %v759
          %761 = vmatmul.bf16.gmra.mxu0 %v569
          %v762 = vpop.f32.mrf.mxu0
          %v763 = vadd.f32 %v455, %v762
          %v764 = vpop.f32.mrf.mxu0
          %v765 = vadd.f32 %v455, %v764
          %766 = vmatmul.bf16.gmra.mxu0 %v571
          %v767 = vpop.f32.mrf.mxu0
          %v768 = vadd.f32 %v455, %v767
          %v769 = vpop.f32.mrf.mxu0
          %v770 = vadd.f32 %v455, %v769
          %771 = vmatmul.bf16.gmra.mxu0 %v573
          %v772 = vpop.f32.mrf.mxu0
          %v773 = vadd.f32 %v455, %v772
          %v774 = vpop.f32.mrf.mxu0
          %v775 = vadd.f32 %v455, %v774
          %776 = vmatmul.bf16.gmra.mxu0 %v575
          %v777 = vpop.f32.mrf.mxu0
          %v778 = vadd.f32 %v455, %v777
          %v779 = vpop.f32.mrf.mxu0
          %v780 = vadd.f32 %v455, %v779
          %781 = vmatmul.bf16.gmra.mxu0 %v577
          %v782 = vpop.f32.mrf.mxu0
          %v783 = vadd.f32 %v455, %v782
          %v784 = vpop.f32.mrf.mxu0
          %v785 = vadd.f32 %v455, %v784
          %786 = vmatmul.bf16.gmra.mxu0 %v579
          %v787 = vpop.f32.mrf.mxu0
          %v788 = vadd.f32 %v455, %v787
          %v789 = vpop.f32.mrf.mxu0
          %v790 = vadd.f32 %v455, %v789
          %791 = vmatmul.bf16.gmra.mxu0 %v581
          %v792 = vpop.f32.mrf.mxu0
          %v793 = vadd.f32 %v455, %v792
          %v794 = vpop.f32.mrf.mxu0
          %v795 = vadd.f32 %v455, %v794
          %796 = vmatmul.bf16.gmra.mxu0 %v583
          %v797 = vpop.f32.mrf.mxu0
          %v798 = vadd.f32 %v455, %v797
          %v799 = vpop.f32.mrf.mxu0
          %v800 = vadd.f32 %v455, %v799
          %801 = vdwg.mxu0
          %802 = vmatpush.bf16.msra.mxu0 %v696
          %803 = vmatpush.bf16.msra.mxu0 %v695
          %804 = vmatpush.bf16.msra.mxu0 %v694
          %805 = vmatpush.bf16.msra.mxu0 %v693
          %806 = vmatpush.bf16.msra.mxu0 %v692
          %807 = vmatpush.bf16.msra.mxu0 %v691
          %808 = vmatpush.bf16.msra.mxu0 %v690
          %809 = vmatpush.bf16.msra.mxu0 %v689
          %810 = vmatmul.bf16.gmra.mxu0 %v554
          %v811 = vpop.f32.mrf.mxu0
          %v812 = vadd.f32 %v723, %v811
          %v813 = vpop.f32.mrf.mxu0
          %v814 = vadd.f32 %v725, %v813
          %815 = vmatmul.bf16.gmra.mxu0 %v556
          %v816 = vpop.f32.mrf.mxu0
          %v817 = vadd.f32 %v728, %v816
          %v818 = vpop.f32.mrf.mxu0
          %v819 = vadd.f32 %v730, %v818
          %820 = vmatmul.bf16.gmra.mxu0 %v558
          %v821 = vpop.f32.mrf.mxu0
          %v822 = vadd.f32 %v733, %v821
          %v823 = vpop.f32.mrf.mxu0
          %v824 = vadd.f32 %v735, %v823
          %825 = vmatmul.bf16.gmra.mxu0 %v560
          %v826 = vpop.f32.mrf.mxu0
          %v827 = vadd.f32 %v738, %v826
          %v828 = vpop.f32.mrf.mxu0
          %v829 = vadd.f32 %v740, %v828
          %830 = vmatmul.bf16.gmra.mxu0 %v562
          %v831 = vpop.f32.mrf.mxu0
          %v832 = vadd.f32 %v743, %v831
          %v833 = vpop.f32.mrf.mxu0
          %v834 = vadd.f32 %v745, %v833
          %835 = vmatmul.bf16.gmra.mxu0 %v564
          %v836 = vpop.f32.mrf.mxu0
          %v837 = vadd.f32 %v748, %v836
          %v838 = vpop.f32.mrf.mxu0
          %v839 = vadd.f32 %v750, %v838
          %840 = vmatmul.bf16.gmra.mxu0 %v566
          %v841 = vpop.f32.mrf.mxu0
          %v842 = vadd.f32 %v753, %v841
          %v843 = vpop.f32.mrf.mxu0
          %v844 = vadd.f32 %v755, %v843
          %845 = vmatmul.bf16.gmra.mxu0 %v568
          %v846 = vpop.f32.mrf.mxu0
          %v847 = vadd.f32 %v758, %v846
          %v848 = vpop.f32.mrf.mxu0
          %v849 = vadd.f32 %v760, %v848
          %850 = vmatmul.bf16.gmra.mxu0 %v570
          %v851 = vpop.f32.mrf.mxu0
          %v852 = vadd.f32 %v763, %v851
          %v853 = vpop.f32.mrf.mxu0
          %v854 = vadd.f32 %v765, %v853
          %855 = vmatmul.bf16.gmra.mxu0 %v572
          %v856 = vpop.f32.mrf.mxu0
          %v857 = vadd.f32 %v768, %v856
          %v858 = vpop.f32.mrf.mxu0
          %v859 = vadd.f32 %v770, %v858
          %860 = vmatmul.bf16.gmra.mxu0 %v574
          %v861 = vpop.f32.mrf.mxu0
          %v862 = vadd.f32 %v773, %v861
          %v863 = vpop.f32.mrf.mxu0
          %v864 = vadd.f32 %v775, %v863
          %865 = vmatmul.bf16.gmra.mxu0 %v576
          %v866 = vpop.f32.mrf.mxu0
          %v867 = vadd.f32 %v778, %v866
          %v868 = vpop.f32.mrf.mxu0
          %v869 = vadd.f32 %v780, %v868
          %870 = vmatmul.bf16.gmra.mxu0 %v578
          %v871 = vpop.f32.mrf.mxu0
          %v872 = vadd.f32 %v783, %v871
          %v873 = vpop.f32.mrf.mxu0
          %v874 = vadd.f32 %v785, %v873
          %875 = vmatmul.bf16.gmra.mxu0 %v580
          %v876 = vpop.f32.mrf.mxu0
          %v877 = vadd.f32 %v788, %v876
          %v878 = vpop.f32.mrf.mxu0
          %v879 = vadd.f32 %v790, %v878
          %880 = vmatmul.bf16.gmra.mxu0 %v582
          %v881 = vpop.f32.mrf.mxu0
          %v882 = vadd.f32 %v793, %v881
          %v883 = vpop.f32.mrf.mxu0
          %v884 = vadd.f32 %v795, %v883
          %885 = vmatmul.bf16.gmra.mxu0 %v584
          %v886 = vpop.f32.mrf.mxu0
          %v887 = vadd.f32 %v798, %v886
          %v888 = vpop.f32.mrf.mxu0
          %v889 = vadd.f32 %v800, %v888
          %890 = vdwg.mxu0
          %v891 = vmax.f32 %v812, 0.0
          %v892 = vmax.f32 %v814, 0.0
          %v893 = vmax.f32 %v817, 0.0
          %v894 = vmax.f32 %v819, 0.0
          %v895 = vmax.f32 %v822, 0.0
          %v896 = vmax.f32 %v824, 0.0
          %v897 = vmax.f32 %v827, 0.0
          %v898 = vmax.f32 %v829, 0.0
          %v899 = vmax.f32 %v832, 0.0
          %v900 = vmax.f32 %v834, 0.0
          %v901 = vmax.f32 %v837, 0.0
          %v902 = vmax.f32 %v839, 0.0
          %v903 = vmax.f32 %v842, 0.0
          %v904 = vmax.f32 %v844, 0.0
          %v905 = vmax.f32 %v847, 0.0
          %v906 = vmax.f32 %v849, 0.0
          %v907 = vmax.f32 %v852, 0.0
          %v908 = vmax.f32 %v854, 0.0
          %v909 = vmax.f32 %v857, 0.0
          %v910 = vmax.f32 %v859, 0.0
          %v911 = vmax.f32 %v862, 0.0
          %v912 = vmax.f32 %v864, 0.0
          %v913 = vmax.f32 %v867, 0.0
          %v914 = vmax.f32 %v869, 0.0
          %v915 = vmax.f32 %v872, 0.0
          %v916 = vmax.f32 %v874, 0.0
          %v917 = vmax.f32 %v877, 0.0
          %v918 = vmax.f32 %v879, 0.0
          %v919 = vmax.f32 %v882, 0.0
          %v920 = vmax.f32 %v884, 0.0
          %v921 = vmax.f32 %v887, 0.0
          %v922 = vmax.f32 %v889, 0.0
          %v923 = vpack.c.bf16 %v892, %v891
          %v924 = vpack.c.bf16 %v894, %v893
          %v925 = vpack.c.bf16 %v896, %v895
          %v926 = vpack.c.bf16 %v898, %v897
          %v927 = vpack.c.bf16 %v900, %v899
          %v928 = vpack.c.bf16 %v902, %v901
          %v929 = vpack.c.bf16 %v904, %v903
          %v930 = vpack.c.bf16 %v906, %v905
          %v931 = vpack.c.bf16 %v908, %v907
          %v932 = vpack.c.bf16 %v910, %v909
          %v933 = vpack.c.bf16 %v912, %v911
          %v934 = vpack.c.bf16 %v914, %v913
          %v935 = vpack.c.bf16 %v916, %v915
          %v936 = vpack.c.bf16 %v918, %v917
          %v937 = vpack.c.bf16 %v920, %v919
          %v938 = vpack.c.bf16 %v922, %v921
          %v939 = vld [vmem:[%s5] sm:$0xf]
          %v940 = vld [vmem:[%s5 + $0x4] sm:$0xf]
          %v941 = vld [vmem:[%s5 + $0x8] sm:$0xf]
          %v942 = vld [vmem:[%s5 + $0xc] sm:$0xf]
          %v943 = vld [vmem:[%s5 + $0x10] sm:$0xf]
          %v944 = vld [vmem:[%s5 + $0x14] sm:$0xf]
          %v945 = vld [vmem:[%s5 + $0x18] sm:$0xf]
          %v946 = vld [vmem:[%s5 + $0x1c] sm:$0xf]
          %v947 = vld [vmem:[%s5 + $0x20] sm:$0xf]
          %v948 = vld [vmem:[%s5 + $0x24] sm:$0xf]
          %v949 = vld [vmem:[%s5 + $0x28] sm:$0xf]
          %v950 = vld [vmem:[%s5 + $0x2c] sm:$0xf]
          %v951 = vld [vmem:[%s5 + $0x30] sm:$0xf]
          %v952 = vld [vmem:[%s5 + $0x34] sm:$0xf]
          %v953 = vld [vmem:[%s5 + $0x38] sm:$0xf]
          %v954 = vld [vmem:[%s5 + $0x3c] sm:$0xf]
          %v971 = vunpack.c.l.b16 %v939
          %v972 = vunpack.c.l.b16 %v940
          %v973 = vunpack.c.l.b16 %v941
          %v974 = vunpack.c.l.b16 %v942
          %v975 = vunpack.c.l.b16 %v943
          %v976 = vunpack.c.l.b16 %v944
          %v977 = vunpack.c.l.b16 %v945
          %v978 = vunpack.c.l.b16 %v946
          %v979 = vunpack.c.l.b16 %v947
          %v980 = vunpack.c.l.b16 %v948
          %v981 = vunpack.c.l.b16 %v949
          %v982 = vunpack.c.l.b16 %v950
          %v983 = vunpack.c.l.b16 %v951
          %v984 = vunpack.c.l.b16 %v952
          %v985 = vunpack.c.l.b16 %v953
          %v986 = vunpack.c.l.b16 %v954
          %v987 = vpack.c.b16 %v972, %v971
          %v988 = vpack.c.b16 %v974, %v973
          %v989 = vpack.c.b16 %v976, %v975
          %v990 = vpack.c.b16 %v978, %v977
          %v991 = vpack.c.b16 %v980, %v979
          %v992 = vpack.c.b16 %v982, %v981
          %v993 = vpack.c.b16 %v984, %v983
          %v994 = vpack.c.b16 %v986, %v985
          %1003 = vmatpush.bf16.msra.mxu0 %v994
          %1004 = vmatpush.bf16.msra.mxu0 %v993
          %1005 = vmatpush.bf16.msra.mxu0 %v992
          %1006 = vmatpush.bf16.msra.mxu0 %v991
          %1007 = vmatpush.bf16.msra.mxu0 %v990
          %1008 = vmatpush.bf16.msra.mxu0 %v989
          %1009 = vmatpush.bf16.msra.mxu0 %v988
          %1010 = vmatpush.bf16.msra.mxu0 %v987
          %1011 = vmatmul.bf16.gmra.mxu0 %v923
          %v1012 = vpop.f32.mrf.mxu0
          %v1013 = vadd.f32 0.0, %v1012
          %v1014 = vpop.f32.mrf.mxu0
          %v1015 = vadd.f32 0.0, %v1014
          %1016 = vmatmul.bf16.gmra.mxu0 %v924
          %v1017 = vpop.f32.mrf.mxu0
          %v1018 = vadd.f32 0.0, %v1017
          %v1019 = vpop.f32.mrf.mxu0
          %v1020 = vadd.f32 0.0, %v1019
          %1021 = vmatmul.bf16.gmra.mxu0 %v925
          %v1022 = vpop.f32.mrf.mxu0
          %v1023 = vadd.f32 0.0, %v1022
          %v1024 = vpop.f32.mrf.mxu0
          %v1025 = vadd.f32 0.0, %v1024
          %1026 = vmatmul.bf16.gmra.mxu0 %v926
          %v1027 = vpop.f32.mrf.mxu0
          %v1028 = vadd.f32 0.0, %v1027
          %v1029 = vpop.f32.mrf.mxu0
          %v1030 = vadd.f32 0.0, %v1029
          %1031 = vmatmul.bf16.gmra.mxu0 %v927
          %v1032 = vpop.f32.mrf.mxu0
          %v1033 = vadd.f32 0.0, %v1032
          %v1034 = vpop.f32.mrf.mxu0
          %v1035 = vadd.f32 0.0, %v1034
          %1036 = vmatmul.bf16.gmra.mxu0 %v928
          %v1037 = vpop.f32.mrf.mxu0
          %v1038 = vadd.f32 0.0, %v1037
          %v1039 = vpop.f32.mrf.mxu0
          %v1040 = vadd.f32 0.0, %v1039
          %1041 = vmatmul.bf16.gmra.mxu0 %v929
          %v1042 = vpop.f32.mrf.mxu0
          %v1043 = vadd.f32 0.0, %v1042
          %v1044 = vpop.f32.mrf.mxu0
          %v1045 = vadd.f32 0.0, %v1044
          %1046 = vmatmul.bf16.gmra.mxu0 %v930
          %v1047 = vpop.f32.mrf.mxu0
          %v1048 = vadd.f32 0.0, %v1047
          %v1049 = vpop.f32.mrf.mxu0
          %v1050 = vadd.f32 0.0, %v1049
          %1051 = vmatmul.bf16.gmra.mxu0 %v931
          %v1052 = vpop.f32.mrf.mxu0
          %v1053 = vadd.f32 0.0, %v1052
          %v1054 = vpop.f32.mrf.mxu0
          %v1055 = vadd.f32 0.0, %v1054
          %1056 = vmatmul.bf16.gmra.mxu0 %v932
          %v1057 = vpop.f32.mrf.mxu0
          %v1058 = vadd.f32 0.0, %v1057
          %v1059 = vpop.f32.mrf.mxu0
          %v1060 = vadd.f32 0.0, %v1059
          %1061 = vmatmul.bf16.gmra.mxu0 %v933
          %v1062 = vpop.f32.mrf.mxu0
          %v1063 = vadd.f32 0.0, %v1062
          %v1064 = vpop.f32.mrf.mxu0
          %v1065 = vadd.f32 0.0, %v1064
          %1066 = vmatmul.bf16.gmra.mxu0 %v934
          %v1067 = vpop.f32.mrf.mxu0
          %v1068 = vadd.f32 0.0, %v1067
          %v1069 = vpop.f32.mrf.mxu0
          %v1070 = vadd.f32 0.0, %v1069
          %1071 = vmatmul.bf16.gmra.mxu0 %v935
          %v1072 = vpop.f32.mrf.mxu0
          %v1073 = vadd.f32 0.0, %v1072
          %v1074 = vpop.f32.mrf.mxu0
          %v1075 = vadd.f32 0.0, %v1074
          %1076 = vmatmul.bf16.gmra.mxu0 %v936
          %v1077 = vpop.f32.mrf.mxu0
          %v1078 = vadd.f32 0.0, %v1077
          %v1079 = vpop.f32.mrf.mxu0
          %v1080 = vadd.f32 0.0, %v1079
          %1081 = vmatmul.bf16.gmra.mxu0 %v937
          %v1082 = vpop.f32.mrf.mxu0
          %v1083 = vadd.f32 0.0, %v1082
          %v1084 = vpop.f32.mrf.mxu0
          %v1085 = vadd.f32 0.0, %v1084
          %1086 = vmatmul.bf16.gmra.mxu0 %v938
          %v1087 = vpop.f32.mrf.mxu0
          %v1088 = vadd.f32 0.0, %v1087
          %v1089 = vpop.f32.mrf.mxu0
          %v1090 = vadd.f32 0.0, %v1089
          %1091 = vdwg.mxu0
          %s1092 = smul.u32 %s24, 256
          %v1093 = vpack.c.bf16 %v1013, %v1013
          %v1094 = vpack.c.bf16 %v1015, %v1015
          %v1095 = vpack.c.bf16 %v1018, %v1018
          %v1096 = vpack.c.bf16 %v1020, %v1020
          %v1097 = vpack.c.bf16 %v1023, %v1023
          %v1098 = vpack.c.bf16 %v1025, %v1025
          %v1099 = vpack.c.bf16 %v1028, %v1028
          %v1100 = vpack.c.bf16 %v1030, %v1030
          %v1101 = vpack.c.bf16 %v1033, %v1033
          %v1102 = vpack.c.bf16 %v1035, %v1035
          %v1103 = vpack.c.bf16 %v1038, %v1038
          %v1104 = vpack.c.bf16 %v1040, %v1040
          %v1105 = vpack.c.bf16 %v1043, %v1043
          %v1106 = vpack.c.bf16 %v1045, %v1045
          %v1107 = vpack.c.bf16 %v1048, %v1048
          %v1108 = vpack.c.bf16 %v1050, %v1050
          %v1109 = vpack.c.bf16 %v1053, %v1053
          %v1110 = vpack.c.bf16 %v1055, %v1055
          %v1111 = vpack.c.bf16 %v1058, %v1058
          %v1112 = vpack.c.bf16 %v1060, %v1060
          %v1113 = vpack.c.bf16 %v1063, %v1063
          %v1114 = vpack.c.bf16 %v1065, %v1065
          %v1115 = vpack.c.bf16 %v1068, %v1068
          %v1116 = vpack.c.bf16 %v1070, %v1070
          %v1117 = vpack.c.bf16 %v1073, %v1073
          %v1118 = vpack.c.bf16 %v1075, %v1075
          %v1119 = vpack.c.bf16 %v1078, %v1078
          %v1120 = vpack.c.bf16 %v1080, %v1080
          %v1121 = vpack.c.bf16 %v1083, %v1083
          %v1122 = vpack.c.bf16 %v1085, %v1085
          %v1123 = vpack.c.bf16 %v1088, %v1088
          %v1124 = vpack.c.bf16 %v1090, %v1090
          %s1125 = sshra.s32 %s1092, 3
          %s1126 = sand.u32 %s1092, 7
          %s1127 = smul.addr %s1125, 4
          %s1128 = scalar_lea.vmem [#allocation2], %s1127
          %1129 = vst [vmem:[%s1128] sm:$0xf] %v1093
          %1130 = vst [vmem:[%s1128 + $0x4] sm:$0xf] %v1094
          %1131 = vst [vmem:[%s1128 + $0x8] sm:$0xf] %v1095
          %1132 = vst [vmem:[%s1128 + $0xc] sm:$0xf] %v1096
          %1133 = vst [vmem:[%s1128 + $0x10] sm:$0xf] %v1097
          %1134 = vst [vmem:[%s1128 + $0x14] sm:$0xf] %v1098
          %1135 = vst [vmem:[%s1128 + $0x18] sm:$0xf] %v1099
          %1136 = vst [vmem:[%s1128 + $0x1c] sm:$0xf] %v1100
          %1137 = vst [vmem:[%s1128 + $0x20] sm:$0xf] %v1101
          %1138 = vst [vmem:[%s1128 + $0x24] sm:$0xf] %v1102
          %1139 = vst [vmem:[%s1128 + $0x28] sm:$0xf] %v1103
          %1140 = vst [vmem:[%s1128 + $0x2c] sm:$0xf] %v1104
          %1141 = vst [vmem:[%s1128 + $0x30] sm:$0xf] %v1105
          %1142 = vst [vmem:[%s1128 + $0x34] sm:$0xf] %v1106
          %1143 = vst [vmem:[%s1128 + $0x38] sm:$0xf] %v1107
          %1144 = vst [vmem:[%s1128 + $0x3c] sm:$0xf] %v1108
          %1145 = vst [vmem:[%s1128 + $0x40] sm:$0xf] %v1109
          %1146 = vst [vmem:[%s1128 + $0x44] sm:$0xf] %v1110
          %1147 = vst [vmem:[%s1128 + $0x48] sm:$0xf] %v1111
          %1148 = vst [vmem:[%s1128 + $0x4c] sm:$0xf] %v1112
          %1149 = vst [vmem:[%s1128 + $0x50] sm:$0xf] %v1113
          %1150 = vst [vmem:[%s1128 + $0x54] sm:$0xf] %v1114
          %1151 = vst [vmem:[%s1128 + $0x58] sm:$0xf] %v1115
          %1152 = vst [vmem:[%s1128 + $0x5c] sm:$0xf] %v1116
          %1153 = vst [vmem:[%s1128 + $0x60] sm:$0xf] %v1117
          %1154 = vst [vmem:[%s1128 + $0x64] sm:$0xf] %v1118
          %1155 = vst [vmem:[%s1128 + $0x68] sm:$0xf] %v1119
          %1156 = vst [vmem:[%s1128 + $0x6c] sm:$0xf] %v1120
          %1157 = vst [vmem:[%s1128 + $0x70] sm:$0xf] %v1121
          %1158 = vst [vmem:[%s1128 + $0x74] sm:$0xf] %v1122
          %1159 = vst [vmem:[%s1128 + $0x78] sm:$0xf] %v1123
          %1160 = vst [vmem:[%s1128 + $0x7c] sm:$0xf] %v1124
        $region56: #{fused_gcn_forward.1} parent=47 // pred_fallthru
          _
        %p1161 = scmp.ge.s32.totalorder %s24, 1
        // Predicated region
        $region57: #{fused_gcn_forward.1} parent=47 // pred_check
          %p1162 = pneg %p1161
        $region58: #{fused_gcn_forward.1} parent=47 // pred_check_branch
          %1164 = sbr.rel (%p1162) target = $region60
        $region59: #{fused_gcn_forward.1} parent=47 // pred_region
          %v1165 = vld [vmem:[%s2] sm:$0xff]
          %v1166 = vld [vmem:[%s2 + $0x8] sm:$0xff]
          %v1167 = vld [vmem:[%s2 + $0x10] sm:$0xff]
          %v1168 = vld [vmem:[%s2 + $0x18] sm:$0xff]
          %v1169 = vld [vmem:[%s2 + $0x20] sm:$0xff]
          %v1170 = vld [vmem:[%s2 + $0x28] sm:$0xff]
          %v1171 = vld [vmem:[%s2 + $0x30] sm:$0xff]
          %v1172 = vld [vmem:[%s2 + $0x38] sm:$0xff]
          %v1173 = vld [vmem:[%s2 + $0x40] sm:$0xff]
          %v1174 = vld [vmem:[%s2 + $0x48] sm:$0xff]
          %v1175 = vld [vmem:[%s2 + $0x50] sm:$0xff]
          %v1176 = vld [vmem:[%s2 + $0x58] sm:$0xff]
          %v1177 = vld [vmem:[%s2 + $0x60] sm:$0xff]
          %v1178 = vld [vmem:[%s2 + $0x68] sm:$0xff]
          %v1179 = vld [vmem:[%s2 + $0x70] sm:$0xff]
          %v1180 = vld [vmem:[%s2 + $0x78] sm:$0xff]
          %v1181 = vld [vmem:[%s2 + $0x80] sm:$0xff]
          %v1182 = vld [vmem:[%s2 + $0x88] sm:$0xff]
          %v1183 = vld [vmem:[%s2 + $0x90] sm:$0xff]
          %v1184 = vld [vmem:[%s2 + $0x98] sm:$0xff]
          %v1185 = vld [vmem:[%s2 + $0xa0] sm:$0xff]
          %v1186 = vld [vmem:[%s2 + $0xa8] sm:$0xff]
          %v1187 = vld [vmem:[%s2 + $0xb0] sm:$0xff]
          %v1188 = vld [vmem:[%s2 + $0xb8] sm:$0xff]
          %v1189 = vld [vmem:[%s2 + $0xc0] sm:$0xff]
          %v1190 = vld [vmem:[%s2 + $0xc8] sm:$0xff]
          %v1191 = vld [vmem:[%s2 + $0xd0] sm:$0xff]
          %v1192 = vld [vmem:[%s2 + $0xd8] sm:$0xff]
          %v1193 = vld [vmem:[%s2 + $0xe0] sm:$0xff]
          %v1194 = vld [vmem:[%s2 + $0xe8] sm:$0xff]
          %v1195 = vld [vmem:[%s2 + $0xf0] sm:$0xff]
          %v1196 = vld [vmem:[%s2 + $0xf8] sm:$0xff]
          %v1197 = vld [vmem:[#allocation2] sm:$0xf]
          %v1198 = vld [vmem:[#allocation2 + $0x4] sm:$0xf]
          %v1199 = vld [vmem:[#allocation2 + $0x8] sm:$0xf]
          %v1200 = vld [vmem:[#allocation2 + $0xc] sm:$0xf]
          %v1201 = vld [vmem:[#allocation2 + $0x10] sm:$0xf]
          %v1202 = vld [vmem:[#allocation2 + $0x14] sm:$0xf]
          %v1203 = vld [vmem:[#allocation2 + $0x18] sm:$0xf]
          %v1204 = vld [vmem:[#allocation2 + $0x1c] sm:$0xf]
          %v1205 = vld [vmem:[#allocation2 + $0x20] sm:$0xf]
          %v1206 = vld [vmem:[#allocation2 + $0x24] sm:$0xf]
          %v1207 = vld [vmem:[#allocation2 + $0x28] sm:$0xf]
          %v1208 = vld [vmem:[#allocation2 + $0x2c] sm:$0xf]
          %v1209 = vld [vmem:[#allocation2 + $0x30] sm:$0xf]
          %v1210 = vld [vmem:[#allocation2 + $0x34] sm:$0xf]
          %v1211 = vld [vmem:[#allocation2 + $0x38] sm:$0xf]
          %v1212 = vld [vmem:[#allocation2 + $0x3c] sm:$0xf]
          %v1213 = vld [vmem:[#allocation2 + $0x40] sm:$0xf]
          %v1214 = vld [vmem:[#allocation2 + $0x44] sm:$0xf]
          %v1215 = vld [vmem:[#allocation2 + $0x48] sm:$0xf]
          %v1216 = vld [vmem:[#allocation2 + $0x4c] sm:$0xf]
          %v1217 = vld [vmem:[#allocation2 + $0x50] sm:$0xf]
          %v1218 = vld [vmem:[#allocation2 + $0x54] sm:$0xf]
          %v1219 = vld [vmem:[#allocation2 + $0x58] sm:$0xf]
          %v1220 = vld [vmem:[#allocation2 + $0x5c] sm:$0xf]
          %v1221 = vld [vmem:[#allocation2 + $0x60] sm:$0xf]
          %v1222 = vld [vmem:[#allocation2 + $0x64] sm:$0xf]
          %v1223 = vld [vmem:[#allocation2 + $0x68] sm:$0xf]
          %v1224 = vld [vmem:[#allocation2 + $0x6c] sm:$0xf]
          %v1225 = vld [vmem:[#allocation2 + $0x70] sm:$0xf]
          %v1226 = vld [vmem:[#allocation2 + $0x74] sm:$0xf]
          %v1227 = vld [vmem:[#allocation2 + $0x78] sm:$0xf]
          %v1228 = vld [vmem:[#allocation2 + $0x7c] sm:$0xf]
          %v1229 = vld [vmem:[%s6] sm:$0x1]
          %v1231 = vperm.slane %v1229, 0
          %v1265 = vunpack.c.l.b16 %v1165
          %v1266 = vunpack.c.h.b16 %v1165
          %v1267 = vunpack.c.l.b16 %v1166
          %v1268 = vunpack.c.h.b16 %v1166
          %v1269 = vunpack.c.l.b16 %v1167
          %v1270 = vunpack.c.h.b16 %v1167
          %v1271 = vunpack.c.l.b16 %v1168
          %v1272 = vunpack.c.h.b16 %v1168
          %v1273 = vunpack.c.l.b16 %v1169
          %v1274 = vunpack.c.h.b16 %v1169
          %v1275 = vunpack.c.l.b16 %v1170
          %v1276 = vunpack.c.h.b16 %v1170
          %v1277 = vunpack.c.l.b16 %v1171
          %v1278 = vunpack.c.h.b16 %v1171
          %v1279 = vunpack.c.l.b16 %v1172
          %v1280 = vunpack.c.h.b16 %v1172
          %v1281 = vunpack.c.l.b16 %v1173
          %v1282 = vunpack.c.h.b16 %v1173
          %v1283 = vunpack.c.l.b16 %v1174
          %v1284 = vunpack.c.h.b16 %v1174
          %v1285 = vunpack.c.l.b16 %v1175
          %v1286 = vunpack.c.h.b16 %v1175
          %v1287 = vunpack.c.l.b16 %v1176
          %v1288 = vunpack.c.h.b16 %v1176
          %v1289 = vunpack.c.l.b16 %v1177
          %v1290 = vunpack.c.h.b16 %v1177
          %v1291 = vunpack.c.l.b16 %v1178
          %v1292 = vunpack.c.h.b16 %v1178
          %v1293 = vunpack.c.l.b16 %v1179
          %v1294 = vunpack.c.h.b16 %v1179
          %v1295 = vunpack.c.l.b16 %v1180
          %v1296 = vunpack.c.h.b16 %v1180
          %v1297 = vunpack.c.l.b16 %v1181
          %v1298 = vunpack.c.h.b16 %v1181
          %v1299 = vunpack.c.l.b16 %v1182
          %v1300 = vunpack.c.h.b16 %v1182
          %v1301 = vunpack.c.l.b16 %v1183
          %v1302 = vunpack.c.h.b16 %v1183
          %v1303 = vunpack.c.l.b16 %v1184
          %v1304 = vunpack.c.h.b16 %v1184
          %v1305 = vunpack.c.l.b16 %v1185
          %v1306 = vunpack.c.h.b16 %v1185
          %v1307 = vunpack.c.l.b16 %v1186
          %v1308 = vunpack.c.h.b16 %v1186
          %v1309 = vunpack.c.l.b16 %v1187
          %v1310 = vunpack.c.h.b16 %v1187
          %v1311 = vunpack.c.l.b16 %v1188
          %v1312 = vunpack.c.h.b16 %v1188
          %v1313 = vunpack.c.l.b16 %v1189
          %v1314 = vunpack.c.h.b16 %v1189
          %v1315 = vunpack.c.l.b16 %v1190
          %v1316 = vunpack.c.h.b16 %v1190
          %v1317 = vunpack.c.l.b16 %v1191
          %v1318 = vunpack.c.h.b16 %v1191
          %v1319 = vunpack.c.l.b16 %v1192
          %v1320 = vunpack.c.h.b16 %v1192
          %v1321 = vunpack.c.l.b16 %v1193
          %v1322 = vunpack.c.h.b16 %v1193
          %v1323 = vunpack.c.l.b16 %v1194
          %v1324 = vunpack.c.h.b16 %v1194
          %v1325 = vunpack.c.l.b16 %v1195
          %v1326 = vunpack.c.h.b16 %v1195
          %v1327 = vunpack.c.l.b16 %v1196
          %v1328 = vunpack.c.h.b16 %v1196
          %v1329 = vpack.c.b16 %v1267, %v1265
          %v1330 = vpack.c.b16 %v1268, %v1266
          %v1331 = vpack.c.b16 %v1271, %v1269
          %v1332 = vpack.c.b16 %v1272, %v1270
          %v1333 = vpack.c.b16 %v1275, %v1273
          %v1334 = vpack.c.b16 %v1276, %v1274
          %v1335 = vpack.c.b16 %v1279, %v1277
          %v1336 = vpack.c.b16 %v1280, %v1278
          %v1337 = vpack.c.b16 %v1283, %v1281
          %v1338 = vpack.c.b16 %v1284, %v1282
          %v1339 = vpack.c.b16 %v1287, %v1285
          %v1340 = vpack.c.b16 %v1288, %v1286
          %v1341 = vpack.c.b16 %v1291, %v1289
          %v1342 = vpack.c.b16 %v1292, %v1290
          %v1343 = vpack.c.b16 %v1295, %v1293
          %v1344 = vpack.c.b16 %v1296, %v1294
          %v1345 = vpack.c.b16 %v1299, %v1297
          %v1346 = vpack.c.b16 %v1300, %v1298
          %v1347 = vpack.c.b16 %v1303, %v1301
          %v1348 = vpack.c.b16 %v1304, %v1302
          %v1349 = vpack.c.b16 %v1307, %v1305
          %v1350 = vpack.c.b16 %v1308, %v1306
          %v1351 = vpack.c.b16 %v1311, %v1309
          %v1352 = vpack.c.b16 %v1312, %v1310
          %v1353 = vpack.c.b16 %v1315, %v1313
          %v1354 = vpack.c.b16 %v1316, %v1314
          %v1355 = vpack.c.b16 %v1319, %v1317
          %v1356 = vpack.c.b16 %v1320, %v1318
          %v1357 = vpack.c.b16 %v1323, %v1321
          %v1358 = vpack.c.b16 %v1324, %v1322
          %v1359 = vpack.c.b16 %v1327, %v1325
          %v1360 = vpack.c.b16 %v1328, %v1326
          %v1425 = vunpack.c.l.b16 %v1197
          %v1426 = vunpack.c.l.b16 %v1198
          %v1427 = vunpack.c.l.b16 %v1199
          %v1428 = vunpack.c.l.b16 %v1200
          %v1429 = vunpack.c.l.b16 %v1201
          %v1430 = vunpack.c.l.b16 %v1202
          %v1431 = vunpack.c.l.b16 %v1203
          %v1432 = vunpack.c.l.b16 %v1204
          %v1433 = vunpack.c.l.b16 %v1205
          %v1434 = vunpack.c.l.b16 %v1206
          %v1435 = vunpack.c.l.b16 %v1207
          %v1436 = vunpack.c.l.b16 %v1208
          %v1437 = vunpack.c.l.b16 %v1209
          %v1438 = vunpack.c.l.b16 %v1210
          %v1439 = vunpack.c.l.b16 %v1211
          %v1440 = vunpack.c.l.b16 %v1212
          %v1441 = vunpack.c.l.b16 %v1213
          %v1442 = vunpack.c.l.b16 %v1214
          %v1443 = vunpack.c.l.b16 %v1215
          %v1444 = vunpack.c.l.b16 %v1216
          %v1445 = vunpack.c.l.b16 %v1217
          %v1446 = vunpack.c.l.b16 %v1218
          %v1447 = vunpack.c.l.b16 %v1219
          %v1448 = vunpack.c.l.b16 %v1220
          %v1449 = vunpack.c.l.b16 %v1221
          %v1450 = vunpack.c.l.b16 %v1222
          %v1451 = vunpack.c.l.b16 %v1223
          %v1452 = vunpack.c.l.b16 %v1224
          %v1453 = vunpack.c.l.b16 %v1225
          %v1454 = vunpack.c.l.b16 %v1226
          %v1455 = vunpack.c.l.b16 %v1227
          %v1456 = vunpack.c.l.b16 %v1228
          %v1457 = vpack.c.b16 %v1426, %v1425
          %v1458 = vpack.c.b16 %v1428, %v1427
          %v1459 = vpack.c.b16 %v1430, %v1429
          %v1460 = vpack.c.b16 %v1432, %v1431
          %v1461 = vpack.c.b16 %v1434, %v1433
          %v1462 = vpack.c.b16 %v1436, %v1435
          %v1463 = vpack.c.b16 %v1438, %v1437
          %v1464 = vpack.c.b16 %v1440, %v1439
          %v1465 = vpack.c.b16 %v1442, %v1441
          %v1466 = vpack.c.b16 %v1444, %v1443
          %v1467 = vpack.c.b16 %v1446, %v1445
          %v1468 = vpack.c.b16 %v1448, %v1447
          %v1469 = vpack.c.b16 %v1450, %v1449
          %v1470 = vpack.c.b16 %v1452, %v1451
          %v1471 = vpack.c.b16 %v1454, %v1453
          %v1472 = vpack.c.b16 %v1456, %v1455
          %1489 = vmatpush.bf16.msra.mxu0 %v1464
          %1490 = vmatpush.bf16.msra.mxu0 %v1463
          %1491 = vmatpush.bf16.msra.mxu0 %v1462
          %1492 = vmatpush.bf16.msra.mxu0 %v1461
          %1493 = vmatpush.bf16.msra.mxu0 %v1460
          %1494 = vmatpush.bf16.msra.mxu0 %v1459
          %1495 = vmatpush.bf16.msra.mxu0 %v1458
          %1496 = vmatpush.bf16.msra.mxu0 %v1457
          %1497 = vmatmul.bf16.gmra.mxu0 %v1329
          %v1498 = vpop.f32.mrf.mxu0
          %v1499 = vadd.f32 %v1231, %v1498
          %v1500 = vpop.f32.mrf.mxu0
          %v1501 = vadd.f32 %v1231, %v1500
          %1502 = vmatmul.bf16.gmra.mxu0 %v1331
          %v1503 = vpop.f32.mrf.mxu0
          %v1504 = vadd.f32 %v1231, %v1503
          %v1505 = vpop.f32.mrf.mxu0
          %v1506 = vadd.f32 %v1231, %v1505
          %1507 = vmatmul.bf16.gmra.mxu0 %v1333
          %v1508 = vpop.f32.mrf.mxu0
          %v1509 = vadd.f32 %v1231, %v1508
          %v1510 = vpop.f32.mrf.mxu0
          %v1511 = vadd.f32 %v1231, %v1510
          %1512 = vmatmul.bf16.gmra.mxu0 %v1335
          %v1513 = vpop.f32.mrf.mxu0
          %v1514 = vadd.f32 %v1231, %v1513
          %v1515 = vpop.f32.mrf.mxu0
          %v1516 = vadd.f32 %v1231, %v1515
          %1517 = vmatmul.bf16.gmra.mxu0 %v1337
          %v1518 = vpop.f32.mrf.mxu0
          %v1519 = vadd.f32 %v1231, %v1518
          %v1520 = vpop.f32.mrf.mxu0
          %v1521 = vadd.f32 %v1231, %v1520
          %1522 = vmatmul.bf16.gmra.mxu0 %v1339
          %v1523 = vpop.f32.mrf.mxu0
          %v1524 = vadd.f32 %v1231, %v1523
          %v1525 = vpop.f32.mrf.mxu0
          %v1526 = vadd.f32 %v1231, %v1525
          %1527 = vmatmul.bf16.gmra.mxu0 %v1341
          %v1528 = vpop.f32.mrf.mxu0
          %v1529 = vadd.f32 %v1231, %v1528
          %v1530 = vpop.f32.mrf.mxu0
          %v1531 = vadd.f32 %v1231, %v1530
          %1532 = vmatmul.bf16.gmra.mxu0 %v1343
          %v1533 = vpop.f32.mrf.mxu0
          %v1534 = vadd.f32 %v1231, %v1533
          %v1535 = vpop.f32.mrf.mxu0
          %v1536 = vadd.f32 %v1231, %v1535
          %1537 = vmatmul.bf16.gmra.mxu0 %v1345
          %v1538 = vpop.f32.mrf.mxu0
          %v1539 = vadd.f32 %v1231, %v1538
          %v1540 = vpop.f32.mrf.mxu0
          %v1541 = vadd.f32 %v1231, %v1540
          %1542 = vmatmul.bf16.gmra.mxu0 %v1347
          %v1543 = vpop.f32.mrf.mxu0
          %v1544 = vadd.f32 %v1231, %v1543
          %v1545 = vpop.f32.mrf.mxu0
          %v1546 = vadd.f32 %v1231, %v1545
          %1547 = vmatmul.bf16.gmra.mxu0 %v1349
          %v1548 = vpop.f32.mrf.mxu0
          %v1549 = vadd.f32 %v1231, %v1548
          %v1550 = vpop.f32.mrf.mxu0
          %v1551 = vadd.f32 %v1231, %v1550
          %1552 = vmatmul.bf16.gmra.mxu0 %v1351
          %v1553 = vpop.f32.mrf.mxu0
          %v1554 = vadd.f32 %v1231, %v1553
          %v1555 = vpop.f32.mrf.mxu0
          %v1556 = vadd.f32 %v1231, %v1555
          %1557 = vmatmul.bf16.gmra.mxu0 %v1353
          %v1558 = vpop.f32.mrf.mxu0
          %v1559 = vadd.f32 %v1231, %v1558
          %v1560 = vpop.f32.mrf.mxu0
          %v1561 = vadd.f32 %v1231, %v1560
          %1562 = vmatmul.bf16.gmra.mxu0 %v1355
          %v1563 = vpop.f32.mrf.mxu0
          %v1564 = vadd.f32 %v1231, %v1563
          %v1565 = vpop.f32.mrf.mxu0
          %v1566 = vadd.f32 %v1231, %v1565
          %1567 = vmatmul.bf16.gmra.mxu0 %v1357
          %v1568 = vpop.f32.mrf.mxu0
          %v1569 = vadd.f32 %v1231, %v1568
          %v1570 = vpop.f32.mrf.mxu0
          %v1571 = vadd.f32 %v1231, %v1570
          %1572 = vmatmul.bf16.gmra.mxu0 %v1359
          %v1573 = vpop.f32.mrf.mxu0
          %v1574 = vadd.f32 %v1231, %v1573
          %v1575 = vpop.f32.mrf.mxu0
          %v1576 = vadd.f32 %v1231, %v1575
          %1577 = vdwg.mxu0
          %1578 = vmatpush.bf16.msra.mxu0 %v1472
          %1579 = vmatpush.bf16.msra.mxu0 %v1471
          %1580 = vmatpush.bf16.msra.mxu0 %v1470
          %1581 = vmatpush.bf16.msra.mxu0 %v1469
          %1582 = vmatpush.bf16.msra.mxu0 %v1468
          %1583 = vmatpush.bf16.msra.mxu0 %v1467
          %1584 = vmatpush.bf16.msra.mxu0 %v1466
          %1585 = vmatpush.bf16.msra.mxu0 %v1465
          %1586 = vmatmul.bf16.gmra.mxu0 %v1330
          %v1587 = vpop.f32.mrf.mxu0
          %v1588 = vadd.f32 %v1499, %v1587
          %v1589 = vpop.f32.mrf.mxu0
          %v1590 = vadd.f32 %v1501, %v1589
          %1591 = vmatmul.bf16.gmra.mxu0 %v1332
          %v1592 = vpop.f32.mrf.mxu0
          %v1593 = vadd.f32 %v1504, %v1592
          %v1594 = vpop.f32.mrf.mxu0
          %v1595 = vadd.f32 %v1506, %v1594
          %1596 = vmatmul.bf16.gmra.mxu0 %v1334
          %v1597 = vpop.f32.mrf.mxu0
          %v1598 = vadd.f32 %v1509, %v1597
          %v1599 = vpop.f32.mrf.mxu0
          %v1600 = vadd.f32 %v1511, %v1599
          %1601 = vmatmul.bf16.gmra.mxu0 %v1336
          %v1602 = vpop.f32.mrf.mxu0
          %v1603 = vadd.f32 %v1514, %v1602
          %v1604 = vpop.f32.mrf.mxu0
          %v1605 = vadd.f32 %v1516, %v1604
          %1606 = vmatmul.bf16.gmra.mxu0 %v1338
          %v1607 = vpop.f32.mrf.mxu0
          %v1608 = vadd.f32 %v1519, %v1607
          %v1609 = vpop.f32.mrf.mxu0
          %v1610 = vadd.f32 %v1521, %v1609
          %1611 = vmatmul.bf16.gmra.mxu0 %v1340
          %v1612 = vpop.f32.mrf.mxu0
          %v1613 = vadd.f32 %v1524, %v1612
          %v1614 = vpop.f32.mrf.mxu0
          %v1615 = vadd.f32 %v1526, %v1614
          %1616 = vmatmul.bf16.gmra.mxu0 %v1342
          %v1617 = vpop.f32.mrf.mxu0
          %v1618 = vadd.f32 %v1529, %v1617
          %v1619 = vpop.f32.mrf.mxu0
          %v1620 = vadd.f32 %v1531, %v1619
          %1621 = vmatmul.bf16.gmra.mxu0 %v1344
          %v1622 = vpop.f32.mrf.mxu0
          %v1623 = vadd.f32 %v1534, %v1622
          %v1624 = vpop.f32.mrf.mxu0
          %v1625 = vadd.f32 %v1536, %v1624
          %1626 = vmatmul.bf16.gmra.mxu0 %v1346
          %v1627 = vpop.f32.mrf.mxu0
          %v1628 = vadd.f32 %v1539, %v1627
          %v1629 = vpop.f32.mrf.mxu0
          %v1630 = vadd.f32 %v1541, %v1629
          %1631 = vmatmul.bf16.gmra.mxu0 %v1348
          %v1632 = vpop.f32.mrf.mxu0
          %v1633 = vadd.f32 %v1544, %v1632
          %v1634 = vpop.f32.mrf.mxu0
          %v1635 = vadd.f32 %v1546, %v1634
          %1636 = vmatmul.bf16.gmra.mxu0 %v1350
          %v1637 = vpop.f32.mrf.mxu0
          %v1638 = vadd.f32 %v1549, %v1637
          %v1639 = vpop.f32.mrf.mxu0
          %v1640 = vadd.f32 %v1551, %v1639
          %1641 = vmatmul.bf16.gmra.mxu0 %v1352
          %v1642 = vpop.f32.mrf.mxu0
          %v1643 = vadd.f32 %v1554, %v1642
          %v1644 = vpop.f32.mrf.mxu0
          %v1645 = vadd.f32 %v1556, %v1644
          %1646 = vmatmul.bf16.gmra.mxu0 %v1354
          %v1647 = vpop.f32.mrf.mxu0
          %v1648 = vadd.f32 %v1559, %v1647
          %v1649 = vpop.f32.mrf.mxu0
          %v1650 = vadd.f32 %v1561, %v1649
          %1651 = vmatmul.bf16.gmra.mxu0 %v1356
          %v1652 = vpop.f32.mrf.mxu0
          %v1653 = vadd.f32 %v1564, %v1652
          %v1654 = vpop.f32.mrf.mxu0
          %v1655 = vadd.f32 %v1566, %v1654
          %1656 = vmatmul.bf16.gmra.mxu0 %v1358
          %v1657 = vpop.f32.mrf.mxu0
          %v1658 = vadd.f32 %v1569, %v1657
          %v1659 = vpop.f32.mrf.mxu0
          %v1660 = vadd.f32 %v1571, %v1659
          %1661 = vmatmul.bf16.gmra.mxu0 %v1360
          %v1662 = vpop.f32.mrf.mxu0
          %v1663 = vadd.f32 %v1574, %v1662
          %v1664 = vpop.f32.mrf.mxu0
          %v1665 = vadd.f32 %v1576, %v1664
          %1666 = vdwg.mxu0
          %v1667 = vlaneseq
          %v1668 = vand.u32 %v1667, 127
          %vm1669 = vcmp.lt.s32.totalorder %v1668, 7
          %v1670 = vsel %vm1669, %v1588, -1e+30
          %v1671 = vsel %vm1669, %v1590, -1e+30
          %v1672 = vsel %vm1669, %v1593, -1e+30
          %v1673 = vsel %vm1669, %v1595, -1e+30
          %v1674 = vsel %vm1669, %v1598, -1e+30
          %v1675 = vsel %vm1669, %v1600, -1e+30
          %v1676 = vsel %vm1669, %v1603, -1e+30
          %v1677 = vsel %vm1669, %v1605, -1e+30
          %v1678 = vsel %vm1669, %v1608, -1e+30
          %v1679 = vsel %vm1669, %v1610, -1e+30
          %v1680 = vsel %vm1669, %v1613, -1e+30
          %v1681 = vsel %vm1669, %v1615, -1e+30
          %v1682 = vsel %vm1669, %v1618, -1e+30
          %v1683 = vsel %vm1669, %v1620, -1e+30
          %v1684 = vsel %vm1669, %v1623, -1e+30
          %v1685 = vsel %vm1669, %v1625, -1e+30
          %v1686 = vsel %vm1669, %v1628, -1e+30
          %v1687 = vsel %vm1669, %v1630, -1e+30
          %v1688 = vsel %vm1669, %v1633, -1e+30
          %v1689 = vsel %vm1669, %v1635, -1e+30
          %v1690 = vsel %vm1669, %v1638, -1e+30
          %v1691 = vsel %vm1669, %v1640, -1e+30
          %v1692 = vsel %vm1669, %v1643, -1e+30
          %v1693 = vsel %vm1669, %v1645, -1e+30
          %v1694 = vsel %vm1669, %v1648, -1e+30
          %v1695 = vsel %vm1669, %v1650, -1e+30
          %v1696 = vsel %vm1669, %v1653, -1e+30
          %v1697 = vsel %vm1669, %v1655, -1e+30
          %v1698 = vsel %vm1669, %v1658, -1e+30
          %v1699 = vsel %vm1669, %v1660, -1e+30
          %v1700 = vsel %vm1669, %v1663, -1e+30
          %v1701 = vsel %vm1669, %v1665, -1e+30
          %1702 = vst [vmem:[%s348] sm:$0xff] %v1670
          %1703 = vst [vmem:[%s348 + $0x8] sm:$0xff] %v1671
          %1704 = vst [vmem:[%s348 + $0x10] sm:$0xff] %v1672
          %1705 = vst [vmem:[%s348 + $0x18] sm:$0xff] %v1673
          %1706 = vst [vmem:[%s348 + $0x20] sm:$0xff] %v1674
          %1707 = vst [vmem:[%s348 + $0x28] sm:$0xff] %v1675
          %1708 = vst [vmem:[%s348 + $0x30] sm:$0xff] %v1676
          %1709 = vst [vmem:[%s348 + $0x38] sm:$0xff] %v1677
          %1710 = vst [vmem:[%s348 + $0x40] sm:$0xff] %v1678
          %1711 = vst [vmem:[%s348 + $0x48] sm:$0xff] %v1679
          %1712 = vst [vmem:[%s348 + $0x50] sm:$0xff] %v1680
          %1713 = vst [vmem:[%s348 + $0x58] sm:$0xff] %v1681
          %1714 = vst [vmem:[%s348 + $0x60] sm:$0xff] %v1682
          %1715 = vst [vmem:[%s348 + $0x68] sm:$0xff] %v1683
          %1716 = vst [vmem:[%s348 + $0x70] sm:$0xff] %v1684
          %1717 = vst [vmem:[%s348 + $0x78] sm:$0xff] %v1685
          %1718 = vst [vmem:[%s348 + $0x80] sm:$0xff] %v1686
          %1719 = vst [vmem:[%s348 + $0x88] sm:$0xff] %v1687
          %1720 = vst [vmem:[%s348 + $0x90] sm:$0xff] %v1688
          %1721 = vst [vmem:[%s348 + $0x98] sm:$0xff] %v1689
          %1722 = vst [vmem:[%s348 + $0xa0] sm:$0xff] %v1690
          %1723 = vst [vmem:[%s348 + $0xa8] sm:$0xff] %v1691
          %1724 = vst [vmem:[%s348 + $0xb0] sm:$0xff] %v1692
          %1725 = vst [vmem:[%s348 + $0xb8] sm:$0xff] %v1693
          %1726 = vst [vmem:[%s348 + $0xc0] sm:$0xff] %v1694
          %1727 = vst [vmem:[%s348 + $0xc8] sm:$0xff] %v1695
          %1728 = vst [vmem:[%s348 + $0xd0] sm:$0xff] %v1696
          %1729 = vst [vmem:[%s348 + $0xd8] sm:$0xff] %v1697
          %1730 = vst [vmem:[%s348 + $0xe0] sm:$0xff] %v1698
          %1731 = vst [vmem:[%s348 + $0xe8] sm:$0xff] %v1699
          %1732 = vst [vmem:[%s348 + $0xf0] sm:$0xff] %v1700
          %1733 = vst [vmem:[%s348 + $0xf8] sm:$0xff] %v1701
          %1734 = vmax.xlane.f32.xlu0 %v1670
          %v1735 = vpop.xlane.xlu0 %1734
          %1736 = vmax.xlane.f32.xlu0 %v1671
          %v1737 = vpop.xlane.xlu0 %1736
          %1738 = vmax.xlane.f32.xlu0 %v1672
          %v1739 = vpop.xlane.xlu0 %1738
          %1740 = vmax.xlane.f32.xlu0 %v1673
          %v1741 = vpop.xlane.xlu0 %1740
          %1742 = vmax.xlane.f32.xlu0 %v1674
          %v1743 = vpop.xlane.xlu0 %1742
          %1744 = vmax.xlane.f32.xlu0 %v1675
          %v1745 = vpop.xlane.xlu0 %1744
          %1746 = vmax.xlane.f32.xlu0 %v1676
          %v1747 = vpop.xlane.xlu0 %1746
          %1748 = vmax.xlane.f32.xlu0 %v1677
          %v1749 = vpop.xlane.xlu0 %1748
          %1750 = vmax.xlane.f32.xlu0 %v1678
          %v1751 = vpop.xlane.xlu0 %1750
          %1752 = vmax.xlane.f32.xlu0 %v1679
          %v1753 = vpop.xlane.xlu0 %1752
          %1754 = vmax.xlane.f32.xlu0 %v1680
          %v1755 = vpop.xlane.xlu0 %1754
          %1756 = vmax.xlane.f32.xlu0 %v1681
          %v1757 = vpop.xlane.xlu0 %1756
          %1758 = vmax.xlane.f32.xlu0 %v1682
          %v1759 = vpop.xlane.xlu0 %1758
          %1760 = vmax.xlane.f32.xlu0 %v1683
          %v1761 = vpop.xlane.xlu0 %1760
          %1762 = vmax.xlane.f32.xlu0 %v1684
          %v1763 = vpop.xlane.xlu0 %1762
          %1764 = vmax.xlane.f32.xlu0 %v1685
          %v1765 = vpop.xlane.xlu0 %1764
          %1766 = vmax.xlane.f32.xlu0 %v1686
          %v1767 = vpop.xlane.xlu0 %1766
          %1768 = vmax.xlane.f32.xlu0 %v1687
          %v1769 = vpop.xlane.xlu0 %1768
          %1770 = vmax.xlane.f32.xlu0 %v1688
          %v1771 = vpop.xlane.xlu0 %1770
          %1772 = vmax.xlane.f32.xlu0 %v1689
          %v1773 = vpop.xlane.xlu0 %1772
          %1774 = vmax.xlane.f32.xlu0 %v1690
          %v1775 = vpop.xlane.xlu0 %1774
          %1776 = vmax.xlane.f32.xlu0 %v1691
          %v1777 = vpop.xlane.xlu0 %1776
          %1778 = vmax.xlane.f32.xlu0 %v1692
          %v1779 = vpop.xlane.xlu0 %1778
          %1780 = vmax.xlane.f32.xlu0 %v1693
          %v1781 = vpop.xlane.xlu0 %1780
          %1782 = vmax.xlane.f32.xlu0 %v1694
          %v1783 = vpop.xlane.xlu0 %1782
          %1784 = vmax.xlane.f32.xlu0 %v1695
          %v1785 = vpop.xlane.xlu0 %1784
          %1786 = vmax.xlane.f32.xlu0 %v1696
          %v1787 = vpop.xlane.xlu0 %1786
          %1788 = vmax.xlane.f32.xlu0 %v1697
          %v1789 = vpop.xlane.xlu0 %1788
          %1790 = vmax.xlane.f32.xlu0 %v1698
          %v1791 = vpop.xlane.xlu0 %1790
          %1792 = vmax.xlane.f32.xlu0 %v1699
          %v1793 = vpop.xlane.xlu0 %1792
          %1794 = vmax.xlane.f32.xlu0 %v1700
          %v1795 = vpop.xlane.xlu0 %1794
          %1796 = vmax.xlane.f32.xlu0 %v1701
          %v1797 = vpop.xlane.xlu0 %1796
          %v1798 = vsub.f32 %v1670, %v1735
          %v1799 = vsub.f32 %v1671, %v1737
          %v1800 = vsub.f32 %v1672, %v1739
          %v1801 = vsub.f32 %v1673, %v1741
          %v1802 = vsub.f32 %v1674, %v1743
          %v1803 = vsub.f32 %v1675, %v1745
          %v1804 = vsub.f32 %v1676, %v1747
          %v1805 = vsub.f32 %v1677, %v1749
          %v1806 = vsub.f32 %v1678, %v1751
          %v1807 = vsub.f32 %v1679, %v1753
          %v1808 = vsub.f32 %v1680, %v1755
          %v1809 = vsub.f32 %v1681, %v1757
          %v1810 = vsub.f32 %v1682, %v1759
          %v1811 = vsub.f32 %v1683, %v1761
          %v1812 = vsub.f32 %v1684, %v1763
          %v1813 = vsub.f32 %v1685, %v1765
          %v1814 = vsub.f32 %v1686, %v1767
          %v1815 = vsub.f32 %v1687, %v1769
          %v1816 = vsub.f32 %v1688, %v1771
          %v1817 = vsub.f32 %v1689, %v1773
          %v1818 = vsub.f32 %v1690, %v1775
          %v1819 = vsub.f32 %v1691, %v1777
          %v1820 = vsub.f32 %v1692, %v1779
          %v1821 = vsub.f32 %v1693, %v1781
          %v1822 = vsub.f32 %v1694, %v1783
          %v1823 = vsub.f32 %v1695, %v1785
          %v1824 = vsub.f32 %v1696, %v1787
          %v1825 = vsub.f32 %v1697, %v1789
          %v1826 = vsub.f32 %v1698, %v1791
          %v1827 = vsub.f32 %v1699, %v1793
          %v1828 = vsub.f32 %v1700, %v1795
          %v1829 = vsub.f32 %v1701, %v1797
          %v1830 = vmul.f32 %v1798, 1.442695
          %v1831 = vpow.pop %v1830
          %v1832 = vmul.f32 %v1799, 1.442695
          %v1833 = vpow.pop %v1832
          %v1834 = vmul.f32 %v1800, 1.442695
          %v1835 = vpow.pop %v1834
          %v1836 = vmul.f32 %v1801, 1.442695
          %v1837 = vpow.pop %v1836
          %v1838 = vmul.f32 %v1802, 1.442695
          %v1839 = vpow.pop %v1838
          %v1840 = vmul.f32 %v1803, 1.442695
          %v1841 = vpow.pop %v1840
          %v1842 = vmul.f32 %v1804, 1.442695
          %v1843 = vpow.pop %v1842
          %v1844 = vmul.f32 %v1805, 1.442695
          %v1845 = vpow.pop %v1844
          %v1846 = vmul.f32 %v1806, 1.442695
          %v1847 = vpow.pop %v1846
          %v1848 = vmul.f32 %v1807, 1.442695
          %v1849 = vpow.pop %v1848
          %v1850 = vmul.f32 %v1808, 1.442695
          %v1851 = vpow.pop %v1850
          %v1852 = vmul.f32 %v1809, 1.442695
          %v1853 = vpow.pop %v1852
          %v1854 = vmul.f32 %v1810, 1.442695
          %v1855 = vpow.pop %v1854
          %v1856 = vmul.f32 %v1811, 1.442695
          %v1857 = vpow.pop %v1856
          %v1858 = vmul.f32 %v1812, 1.442695
          %v1859 = vpow.pop %v1858
          %v1860 = vmul.f32 %v1813, 1.442695
          %v1861 = vpow.pop %v1860
          %v1862 = vmul.f32 %v1814, 1.442695
          %v1863 = vpow.pop %v1862
          %v1864 = vmul.f32 %v1815, 1.442695
          %v1865 = vpow.pop %v1864
          %v1866 = vmul.f32 %v1816, 1.442695
          %v1867 = vpow.pop %v1866
          %v1868 = vmul.f32 %v1817, 1.442695
          %v1869 = vpow.pop %v1868
          %v1870 = vmul.f32 %v1818, 1.442695
          %v1871 = vpow.pop %v1870
          %v1872 = vmul.f32 %v1819, 1.442695
          %v1873 = vpow.pop %v1872
          %v1874 = vmul.f32 %v1820, 1.442695
          %v1875 = vpow.pop %v1874
          %v1876 = vmul.f32 %v1821, 1.442695
          %v1877 = vpow.pop %v1876
          %v1878 = vmul.f32 %v1822, 1.442695
          %v1879 = vpow.pop %v1878
          %v1880 = vmul.f32 %v1823, 1.442695
          %v1881 = vpow.pop %v1880
          %v1882 = vmul.f32 %v1824, 1.442695
          %v1883 = vpow.pop %v1882
          %v1884 = vmul.f32 %v1825, 1.442695
          %v1885 = vpow.pop %v1884
          %v1886 = vmul.f32 %v1826, 1.442695
          %v1887 = vpow.pop %v1886
          %v1888 = vmul.f32 %v1827, 1.442695
          %v1889 = vpow.pop %v1888
          %v1890 = vmul.f32 %v1828, 1.442695
          %v1891 = vpow.pop %v1890
          %v1892 = vmul.f32 %v1829, 1.442695
          %v1893 = vpow.pop %v1892
          %1894 = vadd.xlane.f32.xlu0 %v1831
          %v1895 = vpop.xlane.xlu0 %1894
          %1896 = vadd.xlane.f32.xlu0 %v1833
          %v1897 = vpop.xlane.xlu0 %1896
          %1898 = vadd.xlane.f32.xlu0 %v1835
          %v1899 = vpop.xlane.xlu0 %1898
          %1900 = vadd.xlane.f32.xlu0 %v1837
          %v1901 = vpop.xlane.xlu0 %1900
          %1902 = vadd.xlane.f32.xlu0 %v1839
          %v1903 = vpop.xlane.xlu0 %1902
          %1904 = vadd.xlane.f32.xlu0 %v1841
          %v1905 = vpop.xlane.xlu0 %1904
          %1906 = vadd.xlane.f32.xlu0 %v1843
          %v1907 = vpop.xlane.xlu0 %1906
          %1908 = vadd.xlane.f32.xlu0 %v1845
          %v1909 = vpop.xlane.xlu0 %1908
          %1910 = vadd.xlane.f32.xlu0 %v1847
          %v1911 = vpop.xlane.xlu0 %1910
          %1912 = vadd.xlane.f32.xlu0 %v1849
          %v1913 = vpop.xlane.xlu0 %1912
          %1914 = vadd.xlane.f32.xlu0 %v1851
          %v1915 = vpop.xlane.xlu0 %1914
          %1916 = vadd.xlane.f32.xlu0 %v1853
          %v1917 = vpop.xlane.xlu0 %1916
          %1918 = vadd.xlane.f32.xlu0 %v1855
          %v1919 = vpop.xlane.xlu0 %1918
          %1920 = vadd.xlane.f32.xlu0 %v1857
          %v1921 = vpop.xlane.xlu0 %1920
          %1922 = vadd.xlane.f32.xlu0 %v1859
          %v1923 = vpop.xlane.xlu0 %1922
          %1924 = vadd.xlane.f32.xlu0 %v1861
          %v1925 = vpop.xlane.xlu0 %1924
          %1926 = vadd.xlane.f32.xlu0 %v1863
          %v1927 = vpop.xlane.xlu0 %1926
          %1928 = vadd.xlane.f32.xlu0 %v1865
          %v1929 = vpop.xlane.xlu0 %1928
          %1930 = vadd.xlane.f32.xlu0 %v1867
          %v1931 = vpop.xlane.xlu0 %1930
          %1932 = vadd.xlane.f32.xlu0 %v1869
          %v1933 = vpop.xlane.xlu0 %1932
          %1934 = vadd.xlane.f32.xlu0 %v1871
          %v1935 = vpop.xlane.xlu0 %1934
          %1936 = vadd.xlane.f32.xlu0 %v1873
          %v1937 = vpop.xlane.xlu0 %1936
          %1938 = vadd.xlane.f32.xlu0 %v1875
          %v1939 = vpop.xlane.xlu0 %1938
          %1940 = vadd.xlane.f32.xlu0 %v1877
          %v1941 = vpop.xlane.xlu0 %1940
          %1942 = vadd.xlane.f32.xlu0 %v1879
          %v1943 = vpop.xlane.xlu0 %1942
          %1944 = vadd.xlane.f32.xlu0 %v1881
          %v1945 = vpop.xlane.xlu0 %1944
          %1946 = vadd.xlane.f32.xlu0 %v1883
          %v1947 = vpop.xlane.xlu0 %1946
          %1948 = vadd.xlane.f32.xlu0 %v1885
          %v1949 = vpop.xlane.xlu0 %1948
          %1950 = vadd.xlane.f32.xlu0 %v1887
          %v1951 = vpop.xlane.xlu0 %1950
          %1952 = vadd.xlane.f32.xlu0 %v1889
          %v1953 = vpop.xlane.xlu0 %1952
          %1954 = vadd.xlane.f32.xlu0 %v1891
          %v1955 = vpop.xlane.xlu0 %1954
          %1956 = vadd.xlane.f32.xlu0 %v1893
          %v1957 = vpop.xlane.xlu0 %1956
          %v1958 = vlog2.pop %v1895
          %v1959 = vmul.f32 %v1958, 0.6931472
          %v1960 = vlog2.pop %v1897
          %v1961 = vmul.f32 %v1960, 0.6931472
          %v1962 = vlog2.pop %v1899
          %v1963 = vmul.f32 %v1962, 0.6931472
          %v1964 = vlog2.pop %v1901
          %v1965 = vmul.f32 %v1964, 0.6931472
          %v1966 = vlog2.pop %v1903
          %v1967 = vmul.f32 %v1966, 0.6931472
          %v1968 = vlog2.pop %v1905
          %v1969 = vmul.f32 %v1968, 0.6931472
          %v1970 = vlog2.pop %v1907
          %v1971 = vmul.f32 %v1970, 0.6931472
          %v1972 = vlog2.pop %v1909
          %v1973 = vmul.f32 %v1972, 0.6931472
          %v1974 = vlog2.pop %v1911
          %v1975 = vmul.f32 %v1974, 0.6931472
          %v1976 = vlog2.pop %v1913
          %v1977 = vmul.f32 %v1976, 0.6931472
          %v1978 = vlog2.pop %v1915
          %v1979 = vmul.f32 %v1978, 0.6931472
          %v1980 = vlog2.pop %v1917
          %v1981 = vmul.f32 %v1980, 0.6931472
          %v1982 = vlog2.pop %v1919
          %v1983 = vmul.f32 %v1982, 0.6931472
          %v1984 = vlog2.pop %v1921
          %v1985 = vmul.f32 %v1984, 0.6931472
          %v1986 = vlog2.pop %v1923
          %v1987 = vmul.f32 %v1986, 0.6931472
          %v1988 = vlog2.pop %v1925
          %v1989 = vmul.f32 %v1988, 0.6931472
          %v1990 = vlog2.pop %v1927
          %v1991 = vmul.f32 %v1990, 0.6931472
          %v1992 = vlog2.pop %v1929
          %v1993 = vmul.f32 %v1992, 0.6931472
          %v1994 = vlog2.pop %v1931
          %v1995 = vmul.f32 %v1994, 0.6931472
          %v1996 = vlog2.pop %v1933
          %v1997 = vmul.f32 %v1996, 0.6931472
          %v1998 = vlog2.pop %v1935
          %v1999 = vmul.f32 %v1998, 0.6931472
          %v2000 = vlog2.pop %v1937
          %v2001 = vmul.f32 %v2000, 0.6931472
          %v2002 = vlog2.pop %v1939
          %v2003 = vmul.f32 %v2002, 0.6931472
          %v2004 = vlog2.pop %v1941
          %v2005 = vmul.f32 %v2004, 0.6931472
          %v2006 = vlog2.pop %v1943
          %v2007 = vmul.f32 %v2006, 0.6931472
          %v2008 = vlog2.pop %v1945
          %v2009 = vmul.f32 %v2008, 0.6931472
          %v2010 = vlog2.pop %v1947
          %v2011 = vmul.f32 %v2010, 0.6931472
          %v2012 = vlog2.pop %v1949
          %v2013 = vmul.f32 %v2012, 0.6931472
          %v2014 = vlog2.pop %v1951
          %v2015 = vmul.f32 %v2014, 0.6931472
          %v2016 = vlog2.pop %v1953
          %v2017 = vmul.f32 %v2016, 0.6931472
          %v2018 = vlog2.pop %v1955
          %v2019 = vmul.f32 %v2018, 0.6931472
          %v2020 = vlog2.pop %v1957
          %v2021 = vmul.f32 %v2020, 0.6931472
          %v2022 = vsub.f32 %v1798, %v1959
          %v2023 = vsub.f32 %v1799, %v1961
          %v2024 = vsub.f32 %v1800, %v1963
          %v2025 = vsub.f32 %v1801, %v1965
          %v2026 = vsub.f32 %v1802, %v1967
          %v2027 = vsub.f32 %v1803, %v1969
          %v2028 = vsub.f32 %v1804, %v1971
          %v2029 = vsub.f32 %v1805, %v1973
          %v2030 = vsub.f32 %v1806, %v1975
          %v2031 = vsub.f32 %v1807, %v1977
          %v2032 = vsub.f32 %v1808, %v1979
          %v2033 = vsub.f32 %v1809, %v1981
          %v2034 = vsub.f32 %v1810, %v1983
          %v2035 = vsub.f32 %v1811, %v1985
          %v2036 = vsub.f32 %v1812, %v1987
          %v2037 = vsub.f32 %v1813, %v1989
          %v2038 = vsub.f32 %v1814, %v1991
          %v2039 = vsub.f32 %v1815, %v1993
          %v2040 = vsub.f32 %v1816, %v1995
          %v2041 = vsub.f32 %v1817, %v1997
          %v2042 = vsub.f32 %v1818, %v1999
          %v2043 = vsub.f32 %v1819, %v2001
          %v2044 = vsub.f32 %v1820, %v2003
          %v2045 = vsub.f32 %v1821, %v2005
          %v2046 = vsub.f32 %v1822, %v2007
          %v2047 = vsub.f32 %v1823, %v2009
          %v2048 = vsub.f32 %v1824, %v2011
          %v2049 = vsub.f32 %v1825, %v2013
          %v2050 = vsub.f32 %v1826, %v2015
          %v2051 = vsub.f32 %v1827, %v2017
          %v2052 = vsub.f32 %v1828, %v2019
          %v2053 = vsub.f32 %v1829, %v2021
          %v2054 = vld [vmem:[%s370] sm:$0xff]
          %v2055 = vld [vmem:[%s370 + $0x8] sm:$0xff]
          %v2056 = vld [vmem:[%s370 + $0x10] sm:$0xff]
          %v2057 = vld [vmem:[%s370 + $0x18] sm:$0xff]
          %v2058 = vld [vmem:[%s370 + $0x20] sm:$0xff]
          %v2059 = vld [vmem:[%s370 + $0x28] sm:$0xff]
          %v2060 = vld [vmem:[%s370 + $0x30] sm:$0xff]
          %v2061 = vld [vmem:[%s370 + $0x38] sm:$0xff]
          %v2062 = vld [vmem:[%s370 + $0x40] sm:$0xff]
          %v2063 = vld [vmem:[%s370 + $0x48] sm:$0xff]
          %v2064 = vld [vmem:[%s370 + $0x50] sm:$0xff]
          %v2065 = vld [vmem:[%s370 + $0x58] sm:$0xff]
          %v2066 = vld [vmem:[%s370 + $0x60] sm:$0xff]
          %v2067 = vld [vmem:[%s370 + $0x68] sm:$0xff]
          %v2068 = vld [vmem:[%s370 + $0x70] sm:$0xff]
          %v2069 = vld [vmem:[%s370 + $0x78] sm:$0xff]
          %v2070 = vld [vmem:[%s370 + $0x80] sm:$0xff]
          %v2071 = vld [vmem:[%s370 + $0x88] sm:$0xff]
          %v2072 = vld [vmem:[%s370 + $0x90] sm:$0xff]
          %v2073 = vld [vmem:[%s370 + $0x98] sm:$0xff]
          %v2074 = vld [vmem:[%s370 + $0xa0] sm:$0xff]
          %v2075 = vld [vmem:[%s370 + $0xa8] sm:$0xff]
          %v2076 = vld [vmem:[%s370 + $0xb0] sm:$0xff]
          %v2077 = vld [vmem:[%s370 + $0xb8] sm:$0xff]
          %v2078 = vld [vmem:[%s370 + $0xc0] sm:$0xff]
          %v2079 = vld [vmem:[%s370 + $0xc8] sm:$0xff]
          %v2080 = vld [vmem:[%s370 + $0xd0] sm:$0xff]
          %v2081 = vld [vmem:[%s370 + $0xd8] sm:$0xff]
          %v2082 = vld [vmem:[%s370 + $0xe0] sm:$0xff]
          %v2083 = vld [vmem:[%s370 + $0xe8] sm:$0xff]
          %v2084 = vld [vmem:[%s370 + $0xf0] sm:$0xff]
          %v2085 = vld [vmem:[%s370 + $0xf8] sm:$0xff]
          %2086 = vset.pattern.permute.xlu0 0
          %2087 = vperm.xlu0 %2086, %v2054
          %v2088 = vpop.permute.xlu0 %2087
          %2089 = vset.pattern.permute.xlu0 0
          %2090 = vperm.xlu0 %2089, %v2055
          %v2091 = vpop.permute.xlu0 %2090
          %2092 = vset.pattern.permute.xlu0 0
          %2093 = vperm.xlu0 %2092, %v2056
          %v2094 = vpop.permute.xlu0 %2093
          %2095 = vset.pattern.permute.xlu0 0
          %2096 = vperm.xlu0 %2095, %v2057
          %v2097 = vpop.permute.xlu0 %2096
          %2098 = vset.pattern.permute.xlu0 0
          %2099 = vperm.xlu0 %2098, %v2058
          %v2100 = vpop.permute.xlu0 %2099
          %2101 = vset.pattern.permute.xlu0 0
          %2102 = vperm.xlu0 %2101, %v2059
          %v2103 = vpop.permute.xlu0 %2102
          %2104 = vset.pattern.permute.xlu0 0
          %2105 = vperm.xlu0 %2104, %v2060
          %v2106 = vpop.permute.xlu0 %2105
          %2107 = vset.pattern.permute.xlu0 0
          %2108 = vperm.xlu0 %2107, %v2061
          %v2109 = vpop.permute.xlu0 %2108
          %2110 = vset.pattern.permute.xlu0 0
          %2111 = vperm.xlu0 %2110, %v2062
          %v2112 = vpop.permute.xlu0 %2111
          %2113 = vset.pattern.permute.xlu0 0
          %2114 = vperm.xlu0 %2113, %v2063
          %v2115 = vpop.permute.xlu0 %2114
          %2116 = vset.pattern.permute.xlu0 0
          %2117 = vperm.xlu0 %2116, %v2064
          %v2118 = vpop.permute.xlu0 %2117
          %2119 = vset.pattern.permute.xlu0 0
          %2120 = vperm.xlu0 %2119, %v2065
          %v2121 = vpop.permute.xlu0 %2120
          %2122 = vset.pattern.permute.xlu0 0
          %2123 = vperm.xlu0 %2122, %v2066
          %v2124 = vpop.permute.xlu0 %2123
          %2125 = vset.pattern.permute.xlu0 0
          %2126 = vperm.xlu0 %2125, %v2067
          %v2127 = vpop.permute.xlu0 %2126
          %2128 = vset.pattern.permute.xlu0 0
          %2129 = vperm.xlu0 %2128, %v2068
          %v2130 = vpop.permute.xlu0 %2129
          %2131 = vset.pattern.permute.xlu0 0
          %2132 = vperm.xlu0 %2131, %v2069
          %v2133 = vpop.permute.xlu0 %2132
          %2134 = vset.pattern.permute.xlu0 0
          %2135 = vperm.xlu0 %2134, %v2070
          %v2136 = vpop.permute.xlu0 %2135
          %2137 = vset.pattern.permute.xlu0 0
          %2138 = vperm.xlu0 %2137, %v2071
          %v2139 = vpop.permute.xlu0 %2138
          %2140 = vset.pattern.permute.xlu0 0
          %2141 = vperm.xlu0 %2140, %v2072
          %v2142 = vpop.permute.xlu0 %2141
          %2143 = vset.pattern.permute.xlu0 0
          %2144 = vperm.xlu0 %2143, %v2073
          %v2145 = vpop.permute.xlu0 %2144
          %2146 = vset.pattern.permute.xlu0 0
          %2147 = vperm.xlu0 %2146, %v2074
          %v2148 = vpop.permute.xlu0 %2147
          %2149 = vset.pattern.permute.xlu0 0
          %2150 = vperm.xlu0 %2149, %v2075
          %v2151 = vpop.permute.xlu0 %2150
          %2152 = vset.pattern.permute.xlu0 0
          %2153 = vperm.xlu0 %2152, %v2076
          %v2154 = vpop.permute.xlu0 %2153
          %2155 = vset.pattern.permute.xlu0 0
          %2156 = vperm.xlu0 %2155, %v2077
          %v2157 = vpop.permute.xlu0 %2156
          %2158 = vset.pattern.permute.xlu0 0
          %2159 = vperm.xlu0 %2158, %v2078
          %v2160 = vpop.permute.xlu0 %2159
          %2161 = vset.pattern.permute.xlu0 0
          %2162 = vperm.xlu0 %2161, %v2079
          %v2163 = vpop.permute.xlu0 %2162
          %2164 = vset.pattern.permute.xlu0 0
          %2165 = vperm.xlu0 %2164, %v2080
          %v2166 = vpop.permute.xlu0 %2165
          %2167 = vset.pattern.permute.xlu0 0
          %2168 = vperm.xlu0 %2167, %v2081
          %v2169 = vpop.permute.xlu0 %2168
          %2170 = vset.pattern.permute.xlu0 0
          %2171 = vperm.xlu0 %2170, %v2082
          %v2172 = vpop.permute.xlu0 %2171
          %2173 = vset.pattern.permute.xlu0 0
          %2174 = vperm.xlu0 %2173, %v2083
          %v2175 = vpop.permute.xlu0 %2174
          %2176 = vset.pattern.permute.xlu0 0
          %2177 = vperm.xlu0 %2176, %v2084
          %v2178 = vpop.permute.xlu0 %2177
          %2179 = vset.pattern.permute.xlu0 0
          %2180 = vperm.xlu0 %2179, %v2085
          %v2181 = vpop.permute.xlu0 %2180
          %vm2182 = vcmp.eq.s32.totalorder %v1668, %v2088
          %vm2183 = vcmp.eq.s32.totalorder %v1668, %v2091
          %vm2184 = vcmp.eq.s32.totalorder %v1668, %v2094
          %vm2185 = vcmp.eq.s32.totalorder %v1668, %v2097
          %vm2186 = vcmp.eq.s32.totalorder %v1668, %v2100
          %vm2187 = vcmp.eq.s32.totalorder %v1668, %v2103
          %vm2188 = vcmp.eq.s32.totalorder %v1668, %v2106
          %vm2189 = vcmp.eq.s32.totalorder %v1668, %v2109
          %vm2190 = vcmp.eq.s32.totalorder %v1668, %v2112
          %vm2191 = vcmp.eq.s32.totalorder %v1668, %v2115
          %vm2192 = vcmp.eq.s32.totalorder %v1668, %v2118
          %vm2193 = vcmp.eq.s32.totalorder %v1668, %v2121
          %vm2194 = vcmp.eq.s32.totalorder %v1668, %v2124
          %vm2195 = vcmp.eq.s32.totalorder %v1668, %v2127
          %vm2196 = vcmp.eq.s32.totalorder %v1668, %v2130
          %vm2197 = vcmp.eq.s32.totalorder %v1668, %v2133
          %vm2198 = vcmp.eq.s32.totalorder %v1668, %v2136
          %vm2199 = vcmp.eq.s32.totalorder %v1668, %v2139
          %vm2200 = vcmp.eq.s32.totalorder %v1668, %v2142
          %vm2201 = vcmp.eq.s32.totalorder %v1668, %v2145
          %vm2202 = vcmp.eq.s32.totalorder %v1668, %v2148
          %vm2203 = vcmp.eq.s32.totalorder %v1668, %v2151
          %vm2204 = vcmp.eq.s32.totalorder %v1668, %v2154
          %vm2205 = vcmp.eq.s32.totalorder %v1668, %v2157
          %vm2206 = vcmp.eq.s32.totalorder %v1668, %v2160
          %vm2207 = vcmp.eq.s32.totalorder %v1668, %v2163
          %vm2208 = vcmp.eq.s32.totalorder %v1668, %v2166
          %vm2209 = vcmp.eq.s32.totalorder %v1668, %v2169
          %vm2210 = vcmp.eq.s32.totalorder %v1668, %v2172
          %vm2211 = vcmp.eq.s32.totalorder %v1668, %v2175
          %vm2212 = vcmp.eq.s32.totalorder %v1668, %v2178
          %vm2213 = vcmp.eq.s32.totalorder %v1668, %v2181
          %v2214 = vsel %vm2182, 1, 0
          %v2215 = vsel %vm2183, 1, 0
          %v2216 = vsel %vm2184, 1, 0
          %v2217 = vsel %vm2185, 1, 0
          %v2218 = vsel %vm2186, 1, 0
          %v2219 = vsel %vm2187, 1, 0
          %v2220 = vsel %vm2188, 1, 0
          %v2221 = vsel %vm2189, 1, 0
          %v2222 = vsel %vm2190, 1, 0
          %v2223 = vsel %vm2191, 1, 0
          %v2224 = vsel %vm2192, 1, 0
          %v2225 = vsel %vm2193, 1, 0
          %v2226 = vsel %vm2194, 1, 0
          %v2227 = vsel %vm2195, 1, 0
          %v2228 = vsel %vm2196, 1, 0
          %v2229 = vsel %vm2197, 1, 0
          %v2230 = vsel %vm2198, 1, 0
          %v2231 = vsel %vm2199, 1, 0
          %v2232 = vsel %vm2200, 1, 0
          %v2233 = vsel %vm2201, 1, 0
          %v2234 = vsel %vm2202, 1, 0
          %v2235 = vsel %vm2203, 1, 0
          %v2236 = vsel %vm2204, 1, 0
          %v2237 = vsel %vm2205, 1, 0
          %v2238 = vsel %vm2206, 1, 0
          %v2239 = vsel %vm2207, 1, 0
          %v2240 = vsel %vm2208, 1, 0
          %v2241 = vsel %vm2209, 1, 0
          %v2242 = vsel %vm2210, 1, 0
          %v2243 = vsel %vm2211, 1, 0
          %v2244 = vsel %vm2212, 1, 0
          %v2245 = vsel %vm2213, 1, 0
          %v2246 = vcvt.s32.f32 %v2214
          %v2247 = vcvt.s32.f32 %v2215
          %v2248 = vcvt.s32.f32 %v2216
          %v2249 = vcvt.s32.f32 %v2217
          %v2250 = vcvt.s32.f32 %v2218
          %v2251 = vcvt.s32.f32 %v2219
          %v2252 = vcvt.s32.f32 %v2220
          %v2253 = vcvt.s32.f32 %v2221
          %v2254 = vcvt.s32.f32 %v2222
          %v2255 = vcvt.s32.f32 %v2223
          %v2256 = vcvt.s32.f32 %v2224
          %v2257 = vcvt.s32.f32 %v2225
          %v2258 = vcvt.s32.f32 %v2226
          %v2259 = vcvt.s32.f32 %v2227
          %v2260 = vcvt.s32.f32 %v2228
          %v2261 = vcvt.s32.f32 %v2229
          %v2262 = vcvt.s32.f32 %v2230
          %v2263 = vcvt.s32.f32 %v2231
          %v2264 = vcvt.s32.f32 %v2232
          %v2265 = vcvt.s32.f32 %v2233
          %v2266 = vcvt.s32.f32 %v2234
          %v2267 = vcvt.s32.f32 %v2235
          %v2268 = vcvt.s32.f32 %v2236
          %v2269 = vcvt.s32.f32 %v2237
          %v2270 = vcvt.s32.f32 %v2238
          %v2271 = vcvt.s32.f32 %v2239
          %v2272 = vcvt.s32.f32 %v2240
          %v2273 = vcvt.s32.f32 %v2241
          %v2274 = vcvt.s32.f32 %v2242
          %v2275 = vcvt.s32.f32 %v2243
          %v2276 = vcvt.s32.f32 %v2244
          %v2277 = vcvt.s32.f32 %v2245
          %v2278 = vld [vmem:[#allocation5] sm:$0x1]
          %v2279 = vld [vmem:[%s358] sm:$0xff]
          %v2280 = vld [vmem:[%s358 + $0x8] sm:$0xff]
          %v2281 = vld [vmem:[%s358 + $0x10] sm:$0xff]
          %v2282 = vld [vmem:[%s358 + $0x18] sm:$0xff]
          %v2283 = vld [vmem:[%s358 + $0x20] sm:$0xff]
          %v2284 = vld [vmem:[%s358 + $0x28] sm:$0xff]
          %v2285 = vld [vmem:[%s358 + $0x30] sm:$0xff]
          %v2286 = vld [vmem:[%s358 + $0x38] sm:$0xff]
          %v2287 = vld [vmem:[%s358 + $0x40] sm:$0xff]
          %v2288 = vld [vmem:[%s358 + $0x48] sm:$0xff]
          %v2289 = vld [vmem:[%s358 + $0x50] sm:$0xff]
          %v2290 = vld [vmem:[%s358 + $0x58] sm:$0xff]
          %v2291 = vld [vmem:[%s358 + $0x60] sm:$0xff]
          %v2292 = vld [vmem:[%s358 + $0x68] sm:$0xff]
          %v2293 = vld [vmem:[%s358 + $0x70] sm:$0xff]
          %v2294 = vld [vmem:[%s358 + $0x78] sm:$0xff]
          %v2295 = vld [vmem:[%s358 + $0x80] sm:$0xff]
          %v2296 = vld [vmem:[%s358 + $0x88] sm:$0xff]
          %v2297 = vld [vmem:[%s358 + $0x90] sm:$0xff]
          %v2298 = vld [vmem:[%s358 + $0x98] sm:$0xff]
          %v2299 = vld [vmem:[%s358 + $0xa0] sm:$0xff]
          %v2300 = vld [vmem:[%s358 + $0xa8] sm:$0xff]
          %v2301 = vld [vmem:[%s358 + $0xb0] sm:$0xff]
          %v2302 = vld [vmem:[%s358 + $0xb8] sm:$0xff]
          %v2303 = vld [vmem:[%s358 + $0xc0] sm:$0xff]
          %v2304 = vld [vmem:[%s358 + $0xc8] sm:$0xff]
          %v2305 = vld [vmem:[%s358 + $0xd0] sm:$0xff]
          %v2306 = vld [vmem:[%s358 + $0xd8] sm:$0xff]
          %v2307 = vld [vmem:[%s358 + $0xe0] sm:$0xff]
          %v2308 = vld [vmem:[%s358 + $0xe8] sm:$0xff]
          %v2309 = vld [vmem:[%s358 + $0xf0] sm:$0xff]
          %v2310 = vld [vmem:[%s358 + $0xf8] sm:$0xff]
          %2312 = vset.pattern.permute.xlu0 0
          %2313 = vperm.xlu0 %2312, %v2279
          %v2314 = vpop.permute.xlu0 %2313
          %2317 = vset.pattern.permute.xlu0 0
          %2318 = vperm.xlu0 %2317, %v2280
          %v2319 = vpop.permute.xlu0 %2318
          %2322 = vset.pattern.permute.xlu0 0
          %2323 = vperm.xlu0 %2322, %v2281
          %v2324 = vpop.permute.xlu0 %2323
          %2327 = vset.pattern.permute.xlu0 0
          %2328 = vperm.xlu0 %2327, %v2282
          %v2329 = vpop.permute.xlu0 %2328
          %2332 = vset.pattern.permute.xlu0 0
          %2333 = vperm.xlu0 %2332, %v2283
          %v2334 = vpop.permute.xlu0 %2333
          %2337 = vset.pattern.permute.xlu0 0
          %2338 = vperm.xlu0 %2337, %v2284
          %v2339 = vpop.permute.xlu0 %2338
          %2342 = vset.pattern.permute.xlu0 0
          %2343 = vperm.xlu0 %2342, %v2285
          %v2344 = vpop.permute.xlu0 %2343
          %2347 = vset.pattern.permute.xlu0 0
          %2348 = vperm.xlu0 %2347, %v2286
          %v2349 = vpop.permute.xlu0 %2348
          %2352 = vset.pattern.permute.xlu0 0
          %2353 = vperm.xlu0 %2352, %v2287
          %v2354 = vpop.permute.xlu0 %2353
          %2357 = vset.pattern.permute.xlu0 0
          %2358 = vperm.xlu0 %2357, %v2288
          %v2359 = vpop.permute.xlu0 %2358
          %2362 = vset.pattern.permute.xlu0 0
          %2363 = vperm.xlu0 %2362, %v2289
          %v2364 = vpop.permute.xlu0 %2363
          %2367 = vset.pattern.permute.xlu0 0
          %2368 = vperm.xlu0 %2367, %v2290
          %v2369 = vpop.permute.xlu0 %2368
          %2372 = vset.pattern.permute.xlu0 0
          %2373 = vperm.xlu0 %2372, %v2291
          %v2374 = vpop.permute.xlu0 %2373
          %2377 = vset.pattern.permute.xlu0 0
          %2378 = vperm.xlu0 %2377, %v2292
          %v2379 = vpop.permute.xlu0 %2378
          %2382 = vset.pattern.permute.xlu0 0
          %2383 = vperm.xlu0 %2382, %v2293
          %v2384 = vpop.permute.xlu0 %2383
          %2387 = vset.pattern.permute.xlu0 0
          %2388 = vperm.xlu0 %2387, %v2294
          %v2389 = vpop.permute.xlu0 %2388
          %2392 = vset.pattern.permute.xlu0 0
          %2393 = vperm.xlu0 %2392, %v2295
          %v2394 = vpop.permute.xlu0 %2393
          %2397 = vset.pattern.permute.xlu0 0
          %2398 = vperm.xlu0 %2397, %v2296
          %v2399 = vpop.permute.xlu0 %2398
          %2402 = vset.pattern.permute.xlu0 0
          %2403 = vperm.xlu0 %2402, %v2297
          %v2404 = vpop.permute.xlu0 %2403
          %2407 = vset.pattern.permute.xlu0 0
          %2408 = vperm.xlu0 %2407, %v2298
          %v2409 = vpop.permute.xlu0 %2408
          %2412 = vset.pattern.permute.xlu0 0
          %2413 = vperm.xlu0 %2412, %v2299
          %v2414 = vpop.permute.xlu0 %2413
          %2417 = vset.pattern.permute.xlu0 0
          %2418 = vperm.xlu0 %2417, %v2300
          %v2419 = vpop.permute.xlu0 %2418
          %2422 = vset.pattern.permute.xlu0 0
          %2423 = vperm.xlu0 %2422, %v2301
          %v2424 = vpop.permute.xlu0 %2423
          %2427 = vset.pattern.permute.xlu0 0
          %2428 = vperm.xlu0 %2427, %v2302
          %v2429 = vpop.permute.xlu0 %2428
          %2432 = vset.pattern.permute.xlu0 0
          %2433 = vperm.xlu0 %2432, %v2303
          %v2434 = vpop.permute.xlu0 %2433
          %2437 = vset.pattern.permute.xlu0 0
          %2438 = vperm.xlu0 %2437, %v2304
          %v2439 = vpop.permute.xlu0 %2438
          %2442 = vset.pattern.permute.xlu0 0
          %2443 = vperm.xlu0 %2442, %v2305
          %v2444 = vpop.permute.xlu0 %2443
          %2447 = vset.pattern.permute.xlu0 0
          %2448 = vperm.xlu0 %2447, %v2306
          %v2449 = vpop.permute.xlu0 %2448
          %2452 = vset.pattern.permute.xlu0 0
          %2453 = vperm.xlu0 %2452, %v2307
          %v2454 = vpop.permute.xlu0 %2453
          %2457 = vset.pattern.permute.xlu0 0
          %2458 = vperm.xlu0 %2457, %v2308
          %v2459 = vpop.permute.xlu0 %2458
          %2462 = vset.pattern.permute.xlu0 0
          %2463 = vperm.xlu0 %2462, %v2309
          %v2464 = vpop.permute.xlu0 %2463
          %2467 = vset.pattern.permute.xlu0 0
          %2468 = vperm.xlu0 %2467, %v2310
          %v2469 = vpop.permute.xlu0 %2468
          %v2471 = vmul.f32 %v2314, %v2246
          %v2472 = vmul.f32 %v2319, %v2247
          %v2473 = vmul.f32 %v2324, %v2248
          %v2474 = vmul.f32 %v2329, %v2249
          %v2475 = vmul.f32 %v2334, %v2250
          %v2476 = vmul.f32 %v2339, %v2251
          %v2477 = vmul.f32 %v2344, %v2252
          %v2478 = vmul.f32 %v2349, %v2253
          %v2479 = vmul.f32 %v2354, %v2254
          %v2480 = vmul.f32 %v2359, %v2255
          %v2481 = vmul.f32 %v2364, %v2256
          %v2482 = vmul.f32 %v2369, %v2257
          %v2483 = vmul.f32 %v2374, %v2258
          %v2484 = vmul.f32 %v2379, %v2259
          %v2485 = vmul.f32 %v2384, %v2260
          %v2486 = vmul.f32 %v2389, %v2261
          %v2487 = vmul.f32 %v2394, %v2262
          %v2488 = vmul.f32 %v2399, %v2263
          %v2489 = vmul.f32 %v2404, %v2264
          %v2490 = vmul.f32 %v2409, %v2265
          %v2491 = vmul.f32 %v2414, %v2266
          %v2492 = vmul.f32 %v2419, %v2267
          %v2493 = vmul.f32 %v2424, %v2268
          %v2494 = vmul.f32 %v2429, %v2269
          %v2495 = vmul.f32 %v2434, %v2270
          %v2496 = vmul.f32 %v2439, %v2271
          %v2497 = vmul.f32 %v2444, %v2272
          %v2498 = vmul.f32 %v2449, %v2273
          %v2499 = vmul.f32 %v2454, %v2274
          %v2500 = vmul.f32 %v2459, %v2275
          %v2501 = vmul.f32 %v2464, %v2276
          %v2502 = vmul.f32 %v2469, %v2277
          %v2503 = vmul.f32 %v2471, %v2022
          %v2504 = vmul.f32 %v2472, %v2023
          %v2505 = vmul.f32 %v2473, %v2024
          %v2506 = vmul.f32 %v2474, %v2025
          %v2507 = vmul.f32 %v2475, %v2026
          %v2508 = vmul.f32 %v2476, %v2027
          %v2509 = vmul.f32 %v2477, %v2028
          %v2510 = vmul.f32 %v2478, %v2029
          %v2511 = vmul.f32 %v2479, %v2030
          %v2512 = vmul.f32 %v2480, %v2031
          %v2513 = vmul.f32 %v2481, %v2032
          %v2514 = vmul.f32 %v2482, %v2033
          %v2515 = vmul.f32 %v2483, %v2034
          %v2516 = vmul.f32 %v2484, %v2035
          %v2517 = vmul.f32 %v2485, %v2036
          %v2518 = vmul.f32 %v2486, %v2037
          %v2519 = vmul.f32 %v2487, %v2038
          %v2520 = vmul.f32 %v2488, %v2039
          %v2521 = vmul.f32 %v2489, %v2040
          %v2522 = vmul.f32 %v2490, %v2041
          %v2523 = vmul.f32 %v2491, %v2042
          %v2524 = vmul.f32 %v2492, %v2043
          %v2525 = vmul.f32 %v2493, %v2044
          %v2526 = vmul.f32 %v2494, %v2045
          %v2527 = vmul.f32 %v2495, %v2046
          %v2528 = vmul.f32 %v2496, %v2047
          %v2529 = vmul.f32 %v2497, %v2048
          %v2530 = vmul.f32 %v2498, %v2049
          %v2531 = vmul.f32 %v2499, %v2050
          %v2532 = vmul.f32 %v2500, %v2051
          %v2533 = vmul.f32 %v2501, %v2052
          %v2534 = vmul.f32 %v2502, %v2053
          %v2535 = vadd.f32 %v2503, %v2504
          %v2536 = vadd.f32 %v2535, %v2505
          %v2537 = vadd.f32 %v2536, %v2506
          %v2538 = vadd.f32 %v2537, %v2507
          %v2539 = vadd.f32 %v2538, %v2508
          %v2540 = vadd.f32 %v2539, %v2509
          %v2541 = vadd.f32 %v2540, %v2510
          %v2542 = vadd.f32 %v2541, %v2511
          %v2543 = vadd.f32 %v2542, %v2512
          %v2544 = vadd.f32 %v2543, %v2513
          %v2545 = vadd.f32 %v2544, %v2514
          %v2546 = vadd.f32 %v2545, %v2515
          %v2547 = vadd.f32 %v2546, %v2516
          %v2548 = vadd.f32 %v2547, %v2517
          %v2549 = vadd.f32 %v2548, %v2518
          %v2550 = vadd.f32 %v2549, %v2519
          %v2551 = vadd.f32 %v2550, %v2520
          %v2552 = vadd.f32 %v2551, %v2521
          %v2553 = vadd.f32 %v2552, %v2522
          %v2554 = vadd.f32 %v2553, %v2523
          %v2555 = vadd.f32 %v2554, %v2524
          %v2556 = vadd.f32 %v2555, %v2525
          %v2557 = vadd.f32 %v2556, %v2526
          %v2558 = vadd.f32 %v2557, %v2527
          %v2559 = vadd.f32 %v2558, %v2528
          %v2560 = vadd.f32 %v2559, %v2529
          %v2561 = vadd.f32 %v2560, %v2530
          %v2562 = vadd.f32 %v2561, %v2531
          %v2563 = vadd.f32 %v2562, %v2532
          %v2564 = vadd.f32 %v2563, %v2533
          %v2565 = vadd.f32 %v2564, %v2534
          %2566 = vadd.xlane.f32.xlu0 %v2565
          %v2567 = vpop.xlane.xlu0 %2566
          %v2568 = vrot.slane %v2567, 4
          %v2569 = vadd.f32 %v2567, %v2568
          %v2570 = vrot.slane %v2569, 2
          %v2571 = vadd.f32 %v2569, %v2570
          %v2572 = vrot.slane %v2571, 1
          %v2573 = vadd.f32 %v2571, %v2572
          %s2574 = vtos %v2573
          %s2575 = ssub.f32 0.0, %s2574
          %v2576 = vstv %s2575
          %v2577 = vadd.f32 %v2278, %v2576
          %vm2578 = vcmask 0
          %2579 = vst.msk [vmem:[#allocation5] sm:$0x1] %vm2578, %v2577
        $region60: #{fused_gcn_forward.1} parent=47 // pred_fallthru
          _
        %s2580 = sand.u32 %s207, 1
        %s2581 = scalar_lea.sflag [#allocation4], %s2580
        %s2582 = sand.u32 %s207, 1
        %s2583 = smul.addr %s2582, 256
        %s2584 = scalar_lea.vmem [#allocation3], %s2583
        // Predicated region
        $region61: #{fused_gcn_forward.1} parent=47 // pred_check
          %p2585 = pneg %p217
        $region62: #{fused_gcn_forward.1} parent=47 // pred_check_branch
          %2587 = sbr.rel (%p2585) target = $region64
        $region63: #{fused_gcn_forward.1} parent=47 // pred_region
          %p2588 = scmp.lt.s32.totalorder %s24, 1
          %s2589 = ssub.s32 %s24, 1
          %s2590 = scalar_select %p2588, 0, %s2589
          %s2591 = smul.u32 32, %s2590
          %2593 = vsyncadd %s2581, 0
          %s2594 = smul.addr %s2591, 8
          %s2595 = scalar_lea.hbm %s7, %s2594
          %s2596 = sshll.u32 %s2584, 4
          %s2597 = int_to_ptr.vmem [resolvable:$true] %s2596
          %s2598 = sshll.u32 %s2595, 4
          %s2599 = int_to_ptr.hbm [resolvable:$true] %s2598
          %2604 = dma.vmem_to_hbm [thread:$0]  %s2597, 4096, %s2599, %s2581, 128, 128, 8
        $region64: #{fused_gcn_forward.1} parent=47 // pred_fallthru
          _
        // Predicated region
        $region65: #{fused_gcn_forward.1} parent=47 // pred_check
          %p2605 = pneg %p238
        $region66: #{fused_gcn_forward.1} parent=47 // pred_check_branch
          %2607 = sbr.rel (%p2605) target = $region68
        $region67: #{fused_gcn_forward.1} parent=47 // pred_region
          %2609 = vsyncadd [#allocation6], 0
          %s2611 = sshll.u32 [#allocation5], 4
          %s2612 = int_to_ptr.vmem [resolvable:$true] %s2611
          %s2613 = sshll.u32 %s8, 4
          %s2614 = int_to_ptr.hbm [resolvable:$true] %s2613
          %2616 = dma.vmem_to_hbm [thread:$0]  %s2612, 16, %s2614, [#allocation6]
        $region68: #{fused_gcn_forward.1} parent=47 // pred_fallthru
          _
        // Predicated region
        $region69: #{fused_gcn_forward.1} parent=47 // pred_check
          %p2617 = pneg %p238
        $region70: #{fused_gcn_forward.1} parent=47 // pred_check_branch
          %2619 = sbr.rel (%p2617) target = $region72
        $region71: #{fused_gcn_forward.1} parent=47 // pred_region
          %2621 = dma.done [#allocation6], 16
        $region72: #{fused_gcn_forward.1} parent=47 // pred_fallthru
          _
      $region48: #{fused_gcn_forward.1} parent=5 // pred_fallthru
        _
      %p2622 = scmp.le.s32.totalorder 2, %s19
      // Predicated region
      $region73: #{fused_gcn_forward.1} parent=5 // pred_check
        %p2623 = pneg %p2622
      $region74: #{fused_gcn_forward.1} parent=5 // pred_check_branch
        %2625 = sbr.rel (%p2623) target = $region76
      $region75: #{fused_gcn_forward.1} parent=5 // pred_region
        %s2626 = ssub.s32 %s19, 2
        // Predicated region
        $region77: #{fused_gcn_forward.1} parent=75 // pred_check
          %p2627 = pneg %p223
        $region78: #{fused_gcn_forward.1} parent=75 // pred_check_branch
          %2629 = sbr.rel (%p2627) target = $region80
        $region79: #{fused_gcn_forward.1} parent=75 // pred_region
          %s2630 = sand.u32 %s208, 1
          %s2631 = scalar_lea.sflag [#allocation4], %s2630
          %s2632 = sand.u32 %s208, 1
          %s2633 = smul.addr %s2632, 256
          %s2634 = scalar_lea.vmem [#allocation3], %s2633
          %2636 = dma.done %s2631, 4096
        $region80: #{fused_gcn_forward.1} parent=75 // pred_fallthru
          _
      $region76: #{fused_gcn_forward.1} parent=5 // pred_fallthru
        _
    $region6: #{fused_gcn_forward.1} parent=1 // loop_footer
      %s23 = sadd.s32 1, %s19
    $region7: #{fused_gcn_forward.1} parent=1 // loop_footer_branch
      %18 = sbr.rel target = $region3
    $region8: #{fused_gcn_forward.1} parent=1 // loop_exit
      _
    %2637 = vsyncpa [#allocation4], 1
    %s2638 = scalar_lea.sflag [#allocation4], 1
    %2639 = vsyncpa %s2638, 1
    %2640 = vsyncpa [#allocation6], 1

</llo_original>
